<compile_context>
chip_gen: v7x
topology: tpu7x:2x2x1
jax: 0.10.0
libtpu: 0.0.40
codegen_flags: <defaults>
</compile_context>

<pallas_src>
from functools import partial

import jax
import jax.numpy as jnp
from jax import lax
from jax.experimental import pallas as pl
from jax.experimental.pallas import tpu as pltpu

EPS = 1e-6

_LANE_CHUNK = 512                  # in-kernel reduction chunk (lanes, mult of 128)
_TARGET_BLOCK_BYTES = 6 << 20      # per-input HBM block target (amortizes step overhead)
_SMALL_BLOCK_BYTES = 1 << 20       # below this, triple-buffer the inputs
_MAX_ROWS_PER_STEP = 16384         # bounds unrolled in-kernel code size for tiny H


# ----------------------------------------------------------------------------
# Kernel
# ----------------------------------------------------------------------------
def _cos_sigmoid_kernel(a_ref, b_ref, o_ref, *, precision):
    # a_ref, b_ref : (TM, H) input tiles in VMEM
    # o_ref        : (1, 1, TM) lane-dense output tile
    tm, h = a_ref.shape
    ch = _LANE_CHUNK
    n_full, rem = (h // ch, h % ch) if h > ch else (0, h)

    def rowsums(a, b, ones_row):
        # NT-form thin matmuls (flash-attention's Q @ K^T operand orientation):
        # ones(1,k) contracted against the products' lane axis gives lane-major
        # (1, TM) partials -> unmasked lane-dense output store, no relayout.
        # Each output lane only reads its own row, so OOB tail rows stay local.
        def rs(x):
            return lax.dot_general(
                ones_row, x,
                dimension_numbers=(((1,), (1,)), ((), ())),
                precision=precision,
                preferred_element_type=jnp.float32)
        return rs(a * b), rs(a * a), rs(b * b)

    if n_full == 0:
        # Small-H fast path: single full-width reduction (test shapes land here).
        a = a_ref[...].astype(jnp.float32)
        b = b_ref[...].astype(jnp.float32)
        dot, sa, sb = rowsums(a, b, jnp.ones((1, h), jnp.float32))
    else:
        # Large H: stream 512-lane chunks so only one chunk of f32 temporaries
        # is live at a time (bounded VMEM, larger row tiles).
        zeros = jnp.zeros((1, tm), jnp.float32)
        ones_c = jnp.ones((1, ch), jnp.float32)      # hoisted out of the loop

        def body(i, carry):
            d, x2, y2 = carry
            lo = pl.multiple_of(i * ch, ch)
            a = a_ref[:, pl.ds(lo, ch)].astype(jnp.float32)
            b = b_ref[:, pl.ds(lo, ch)].astype(jnp.float32)
            pd, px, py = rowsums(a, b, ones_c)
            return d + pd, x2 + px, y2 + py

        dot, sa, sb = lax.fori_loop(0, n_full, body, (zeros, zeros, zeros))

        if rem > 0:
            a = a_ref[:, n_full * ch:].astype(jnp.float32)
            b = b_ref[:, n_full * ch:].astype(jnp.float32)
            pd, px, py = rowsums(a, b, jnp.ones((1, rem), jnp.float32))
            dot, sa, sb = dot + pd, sa + px, sb + py

    # ATen cosine_similarity: dot / sqrt(max(||a||^2 * ||b||^2, eps^2))
    cos = dot * lax.rsqrt(jnp.maximum(sa * sb, EPS * EPS))
    sig = 1.0 / (1.0 + jnp.exp(-cos))
    o_ref[0] = sig.astype(o_ref.dtype)


# ----------------------------------------------------------------------------
# Tiling / VMEM heuristics
# ----------------------------------------------------------------------------
def _cdiv(a, b):
    return -(-a // b)


def _round_up(x, m):
    return ((x + m - 1) // m) * m


def _packed_sublanes(itemsize):
    # packed-sublane multiple: f32 -> 8, bf16 -> 16, int8/fp8 -> 32
    return 8 * max(1, 4 // max(1, int(itemsize)))


def _vmem_budget_and_capacity(budget_override=None):
    capacity = 64 * 1024 * 1024
    try:
        capacity = int(pltpu.get_tpu_info().vmem_capacity_bytes)
    except Exception:
        pass
    if budget_override is not None:
        return int(budget_override), capacity
    if capacity >= 100 * 1024 * 1024:      # v5e / v6e: 128 MiB physical VMEM
        budget = 56 * 1024 * 1024
    else:                                  # v7x: 64 MiB per TensorCore
        budget = 24 * 1024 * 1024
    return budget, capacity


def _choose_tiling(n_rows, hidden, itemsize, vmem_budget_bytes):
    sub = _packed_sublanes(itemsize)
    row_bytes = hidden * itemsize
    ch = min(hidden, _LANE_CHUNK)
    # per-row VMEM: 2 inputs x 2 pipeline buffers (raw dtype) + f32 temporaries
    # bounded by the in-kernel lane chunk (upcasts + 3 products).
    per_row = 4 * row_bytes + 6 * 4 * ch
    tm = min(
        max(sub, vmem_budget_bytes // per_row),
        max(sub, _TARGET_BLOCK_BYTES // max(1, row_bytes)),   # bytes-based cap
        _MAX_ROWS_PER_STEP,
        _round_up(n_rows, sub),
    )
    unit = 128 if tm >= 128 else sub
    tm = max(unit, (tm // unit) * unit)

    nb = _cdiv(n_rows, tm)
    if n_rows >= 256:
        # Prefer >=2 (>=4 for big inputs) and an even number of grid steps:
        # keeps both v7x TensorCores fed/balanced and enables DMA/compute
        # overlap; v5e/v6e are single-TC and only pay a negligible extra step.
        want = 4 if n_rows >= 1024 else 2
        chosen = None
        for cand_nb in range(max(nb, want), max(nb, want) + 6):
            tm_c = max(unit, _round_up(_cdiv(n_rows, cand_nb), unit))
            if tm_c > tm:
                continue
            nb_c = _cdiv(n_rows, tm_c)
            if nb_c < want:
                continue
            if chosen is None:
                chosen = (tm_c, nb_c)
            if nb_c % 2 == 0:
                chosen = (tm_c, nb_c)
                break
        if chosen is not None:
            tm, nb = chosen
    return int(tm), int(nb)


def _input_spec(tm, h, triple_buffer):
    idx = lambda i: (i, 0)
    if triple_buffer:
        try:
            return pl.BlockSpec((tm, h), idx, pipeline_mode=pl.Buffered(3))
        except Exception:
            pass  # older BlockSpec without pipeline_mode: plain double buffering
    return pl.BlockSpec((tm, h), idx)


# ----------------------------------------------------------------------------
# Wrapper
# ----------------------------------------------------------------------------
def cosine_instruction_trace_difference(first, second, *, row_tile=None,
                                        vmem_budget_bytes=None):
    """sigmoid(cosine_similarity(first, second, dim=-1, eps=1e-6)).

    first, second: (..., H). Returns leading-dims shape, dtype = first.dtype.
    """
    assert first.shape == second.shape, (first.shape, second.shape)
    lead = first.shape[:-1]
    H = int(first.shape[-1])
    N = 1
    for d in lead:
        N *= int(d)
    out_dtype = first.dtype
    if N == 0:
        return jnp.zeros(lead, out_dtype)

    a2 = first.reshape(N, H)       # layout-preserving reshape; no HBM copy
    b2 = second.reshape(N, H)
    itemsize = int(jnp.dtype(first.dtype).itemsize)

    budget, capacity = _vmem_budget_and_capacity(vmem_budget_bytes)
    if row_tile is not None:
        sub = _packed_sublanes(itemsize)
        unit = 128 if int(row_tile) >= 128 else sub
        tm = max(unit, (int(row_tile) // unit) * unit)
        nb = _cdiv(N, tm)
    else:
        tm, nb = _choose_tiling(N, H, itemsize, budget)

    inp_block = tm * H * itemsize
    triple = (inp_block < _SMALL_BLOCK_BYTES) and (nb >= 3)
    nbuf = 3 if triple else 2

    # vmem_limit derived from the actual footprint (+25% slack + 2 MiB), not a
    # hardcoded constant; clamped to 3/4 of the detected physical capacity.
    ch = min(H, _LANE_CHUNK)
    out_itemsize = int(jnp.dtype(out_dtype).itemsize)
    footprint = (2 * nbuf * inp_block                       # pipelined input windows
                 + nbuf * 8 * tm * max(out_itemsize, 4)     # (1,tm) output windows (padded)
                 + 6 * tm * ch * 4                          # f32 chunk temporaries
                 + 4 * tm * 4)                              # lane-major accumulators
    vmem_limit = int(footprint * 1.25) + (2 << 20)
    vmem_limit = min(max(vmem_limit, 8 << 20), (capacity * 3) // 4)

    def run(precision):
        return pl.pallas_call(
            partial(_cos_sigmoid_kernel, precision=precision),
            out_shape=jax.ShapeDtypeStruct((nb, 1, tm), out_dtype),
            grid_spec=pltpu.PrefetchScalarGridSpec(
                num_scalar_prefetch=0,
                grid=(nb,),
                in_specs=[_input_spec(tm, H, triple),
                          _input_spec(tm, H, triple)],
                out_specs=pl.BlockSpec((1, 1, tm), lambda i: (i, 0, 0)),
            ),
            compiler_params=pltpu.CompilerParams(
                dimension_semantics=("parallel",),
                vmem_limit_bytes=int(vmem_limit),
            ),
        )(a2, b2)

    # Precision.HIGH halves (or better) the MXU pass traffic vs HIGHEST while
    # keeping ~f32 accuracy; fall back to HIGHEST if this Mosaic build rejects it.
    last_err = None
    out = None
    for prec in (lax.Precision.HIGH, lax.Precision.HIGHEST):
        try:
            out = run(prec)
            break
        except Exception as e:  # noqa: BLE001 - lowering rejection only
            last_err = e
    if out is None:
        raise last_err

    return out.reshape(nb * tm)[:N].reshape(lead)


# ----------------------------------------------------------------------------
# Reference + self-test
# ----------------------------------------------------------------------------
def _reference(first, second):
    a = first.astype(jnp.float32)
    b = second.astype(jnp.float32)
    dot = jnp.sum(a * b, axis=-1)
    sa = jnp.sum(a * a, axis=-1)
    sb = jnp.sum(b * b, axis=-1)
    cos = dot / jnp.sqrt(jnp.maximum(sa * sb, EPS * EPS))
    return (1.0 / (1.0 + jnp.exp(-cos))).astype(first.dtype)


if __name__ == "__main__":
    key = jax.random.PRNGKey(0)
    k1, k2, k3, k4, k5, k6 = jax.random.split(key, 6)

    # (batch, seq, hidden) as implied by the module's forward.
    B, S, H = 2, 8, 32
    first = jax.random.normal(k1, (B, S, H), dtype=jnp.float32)
    second = jax.random.normal(k2, (B, S, H), dtype=jnp.float32)
    out = jax.block_until_ready(cosine_instruction_trace_difference(first, second))
    ref = _reference(first, second)
    assert out.shape == (B, S), out.shape
    assert jnp.allclose(out, ref, atol=1e-5, rtol=1e-5)

    # Multi-step grid + ragged tail block (rows not a multiple of the tile).
    B2, S2, H2 = 3, 100, 32
    f2 = jax.random.normal(k3, (B2, S2, H2), dtype=jnp.float32)
    s2 = jax.random.normal(k4, (B2, S2, H2), dtype=jnp.float32)
    out2 = jax.block_until_ready(cosine_instruction_trace_difference(f2, s2))
    ref2 = _reference(f2, s2)
    assert out2.shape == (B2, S2), out2.shape
    assert jnp.allclose(out2, ref2, atol=1e-5, rtol=1e-5)

    # bf16 path exercises the packed-sublane (16-row) tile rounding.
    f3 = jax.random.normal(k5, (B, S, H), dtype=jnp.bfloat16)
    s3 = jax.random.normal(k6, (B, S, H), dtype=jnp.bfloat16)
    out3 = jax.block_until_ready(cosine_instruction_trace_difference(f3, s3))
    ref3 = _reference(f3, s3)
    assert out3.shape == (B, S), out3.shape
    assert jnp.allclose(out3.astype(jnp.float32), ref3.astype(jnp.float32),
                        atol=1e-2, rtol=1e-2)

    print("KERNEL_OK")
</pallas_src>

<mosaic_0001>
module attributes {stable_mosaic.version = 11 : i64} {
  func.func @_cos_sigmoid_kernel(%arg0: i32, %arg1: memref<16x32xf32, #tpu.memory_space<vmem>>, %arg2: memref<16x32xf32, #tpu.memory_space<vmem>>, %arg3: memref<1x1x16xf32, #tpu.memory_space<vmem>>) attributes {dimension_semantics = [#tpu.dimension_semantics<parallel>], iteration_bounds = array<i64: 1>, scalar_prefetch = 0 : i64, scratch_operands = 0 : i64, tpu.core_type = #tpu.core_type<tc>, window_params = [{transform_indices = @transform_0, window_bounds = array<i64: 16, 32>}, {transform_indices = @transform_1, window_bounds = array<i64: 16, 32>}, {transform_indices = @transform_2, window_bounds = array<i64: 1, 1, 16>}]} {
    %c0 = arith.constant 0 : index
    %c0_0 = arith.constant 0 : index
    %0 = vector.load %arg1[%c0, %c0_0] : memref<16x32xf32, #tpu.memory_space<vmem>>, vector<16x32xf32>
    %c0_1 = arith.constant 0 : index
    %c0_2 = arith.constant 0 : index
    %1 = vector.load %arg2[%c0_1, %c0_2] : memref<16x32xf32, #tpu.memory_space<vmem>>, vector<16x32xf32>
    %cst = arith.constant 1.000000e+00 : f32
    %2 = vector.broadcast %cst : f32 to vector<1x32xf32>
    %3 = arith.mulf %0, %1 : vector<16x32xf32>
    %cst_3 = arith.constant dense<0.000000e+00> : vector<1x16xf32>
    %4 = tpu.matmul %2, %3, %cst_3 {dimension_numbers = #tpu.dot_dimension_numbers<[1], [1], [0], [0], [0, 0, 1, 0], [], []>, precision = #tpu.contract_precision<fp32>} : vector<1x32xf32>, vector<16x32xf32>, vector<1x16xf32> -> vector<1x16xf32>
    %5 = arith.mulf %0, %0 : vector<16x32xf32>
    %cst_4 = arith.constant dense<0.000000e+00> : vector<1x16xf32>
    %6 = tpu.matmul %2, %5, %cst_4 {dimension_numbers = #tpu.dot_dimension_numbers<[1], [1], [0], [0], [0, 0, 1, 0], [], []>, precision = #tpu.contract_precision<fp32>} : vector<1x32xf32>, vector<16x32xf32>, vector<1x16xf32> -> vector<1x16xf32>
    %7 = arith.mulf %1, %1 : vector<16x32xf32>
    %cst_5 = arith.constant dense<0.000000e+00> : vector<1x16xf32>
    %8 = tpu.matmul %2, %7, %cst_5 {dimension_numbers = #tpu.dot_dimension_numbers<[1], [1], [0], [0], [0, 0, 1, 0], [], []>, precision = #tpu.contract_precision<fp32>} : vector<1x32xf32>, vector<16x32xf32>, vector<1x16xf32> -> vector<1x16xf32>
    %9 = arith.mulf %6, %8 : vector<1x16xf32>
    %cst_6 = arith.constant 9.99999996E-13 : f32
    %10 = vector.broadcast %cst_6 : f32 to vector<1x16xf32>
    %11 = arith.maximumf %9, %10 : vector<1x16xf32>
    %12 = math.rsqrt %11 : vector<1x16xf32>
    %13 = arith.mulf %4, %12 : vector<1x16xf32>
    %cst_7 = arith.constant 0.000000e+00 : f32
    %14 = vector.broadcast %cst_7 : f32 to vector<1x16xf32>
    %15 = arith.subf %14, %13 : vector<1x16xf32>
    %16 = math.exp %15 : vector<1x16xf32>
    %cst_8 = arith.constant 1.000000e+00 : f32
    %17 = vector.broadcast %cst_8 : f32 to vector<1x16xf32>
    %18 = arith.addf %17, %16 : vector<1x16xf32>
    %cst_9 = arith.constant 1.000000e+00 : f32
    %19 = vector.broadcast %cst_9 : f32 to vector<1x16xf32>
    %20 = arith.divf %19, %18 : vector<1x16xf32>
    %c0_10 = arith.constant 0 : index
    %c0_11 = arith.constant 0 : index
    %c0_12 = arith.constant 0 : index
    %21 = vector.load %arg3[%c0_10, %c0_11, %c0_12] : memref<1x1x16xf32, #tpu.memory_space<vmem>>, vector<1x1x16xf32>
    %22 = vector.shape_cast %21 : vector<1x1x16xf32> to vector<1x16xf32>
    %23 = vector.shape_cast %20 : vector<1x16xf32> to vector<1x1x16xf32>
    tpu.vector_store %arg3[%c0_10, %c0_11, %c0_12], %23 {strides = array<i32>} : memref<1x1x16xf32, #tpu.memory_space<vmem>>, vector<1x1x16xf32>,
    return
  }
  func.func @transform_0(%arg0: i32) -> (i32, i32) {
    %c0_i32 = arith.constant 0 : i32
    %c0_i32_0 = arith.constant 0 : i32
    return %arg0, %c0_i32 : i32, i32
  }
  func.func @transform_1(%arg0: i32) -> (i32, i32) {
    %c0_i32 = arith.constant 0 : i32
    %c0_i32_0 = arith.constant 0 : i32
    return %arg0, %c0_i32 : i32, i32
  }
  func.func @transform_2(%arg0: i32) -> (i32, i32, i32) {
    %c0_i32 = arith.constant 0 : i32
    %c0_i32_0 = arith.constant 0 : i32
    %c0_i32_1 = arith.constant 0 : i32
    return %arg0, %c0_i32, %c0_i32_0 : i32, i32, i32
  }
}

</mosaic_0001>

<llo_original>
// kernel: tpu_custom_call.1
$region0: #{tpu_custom_call.1}
  #allocation0 [shape = 'u32[]', space=smem, size = 0x4, offset = 0x4, fixed_abs, tag = 'smem constant byte address 0x4 - core index']
  #allocation1 [shape = 'u32[144,128]{1,0:T(1,128)}', space=vmem, size = 0x12000, scoped, tag = 'internal scratch']
  %s0 = inlined_call_operand.hbm [shape: f32[16,32], index: 0, kind: input, shape index: {}]
  %s1 = inlined_call_operand.hbm [shape: f32[16,32], index: 1, kind: input, shape index: {}]
  %s2 = inlined_call_operand.hbm [shape: f32[1,1,16], index: 2, kind: output, shape index: {}]
  %s3 = sld [smem:[#allocation0]]
  $region26: #{tpu_custom_call.1} parent=0
    _
  %s5 = ssub.s32 1, %s3
  %s6 = scalar_select 0, %s5, %s3
  $region1: #{tpu_custom_call.1} parent=0
    #allocation2 [shape = 'u8[8192]{0}', space=vmem, size = 0x2000, scoped, tag = 'input window, operand 0, single buffered']
    #allocation3 [shape = 's32[1]{0}', space=sflag, size = 0x4, scoped, tag = 'scoped memory for tpu_custom_call.1']
    #allocation4 [shape = 's32[1]{0}', space=sflag, size = 0x4, scoped, tag = 'scoped memory for tpu_custom_call.1']
    #allocation5 [shape = 'u8[8192]{0}', space=vmem, size = 0x2000, scoped, tag = 'input window, operand 1, single buffered']
    #allocation6 [shape = 's32[1]{0}', space=sflag, size = 0x4, scoped, tag = 'scoped memory for tpu_custom_call.1']
    #allocation7 [shape = 'u8[512]{0}', space=vmem, size = 0x400, scoped, tag = 'output window, operand 0, single buffered']
    %7 = vsyncpa [#allocation3], 0
    %8 = vsyncpa [#allocation6], 0
    %9 = vsyncpa [#allocation4], 0
    // Predicated region
    $region2: #{tpu_custom_call.1} parent=1 // pred_check
      _
    $region3: #{tpu_custom_call.1} parent=1 // pred_check_branch
      %11 = sbr.rel (0) target = $region5
    $region4: #{tpu_custom_call.1} parent=1 // pred_region
      %s13 = ssub.s32 256, 256
      %14 = vsyncadd [#allocation3], %s13
      %s15 = sshll.u32 [#allocation2], 4
      %s16 = int_to_ptr.vmem [resolvable:$true] %s15
      %21 = dma.hbm_to_vmem [thread:$0]  %s0, 256, %s16, [#allocation3], 128, 128, 8
    $region5: #{tpu_custom_call.1} parent=1 // pred_fallthru
      _
    // Predicated region
    $region6: #{tpu_custom_call.1} parent=1 // pred_check
      _
    $region7: #{tpu_custom_call.1} parent=1 // pred_check_branch
      %23 = sbr.rel (0) target = $region9
    $region8: #{tpu_custom_call.1} parent=1 // pred_region
      %s25 = ssub.s32 256, 256
      %26 = vsyncadd [#allocation6], %s25
      %s27 = sshll.u32 [#allocation5], 4
      %s28 = int_to_ptr.vmem [resolvable:$true] %s27
      %33 = dma.hbm_to_vmem [thread:$0]  %s1, 256, %s28, [#allocation6], 128, 128, 8
    $region9: #{tpu_custom_call.1} parent=1 // pred_fallthru
      _
    // Predicated region
    $region10: #{tpu_custom_call.1} parent=1 // pred_check
      _
    $region11: #{tpu_custom_call.1} parent=1 // pred_check_branch
      %35 = sbr.rel (0) target = $region13
    $region12: #{tpu_custom_call.1} parent=1 // pred_region
      %36 = dma.done [#allocation3], 256
    $region13: #{tpu_custom_call.1} parent=1 // pred_fallthru
      _
    // Predicated region
    $region14: #{tpu_custom_call.1} parent=1 // pred_check
      _
    $region15: #{tpu_custom_call.1} parent=1 // pred_check_branch
      %38 = sbr.rel (0) target = $region17
    $region16: #{tpu_custom_call.1} parent=1 // pred_region
      %39 = dma.done [#allocation6], 256
    $region17: #{tpu_custom_call.1} parent=1 // pred_fallthru
      _
    %v40 = vld [vmem:[#allocation2] sm:$0xff]
    %v41 = vld [vmem:[#allocation2 + $0x8] sm:$0xff]
    %v42 = vld [vmem:[#allocation5] sm:$0xff]
    %v43 = vld [vmem:[#allocation5 + $0x8] sm:$0xff]
    %v44 = vmul.f32 %v40, %v42
    %v45 = vmul.f32 %v41, %v43
    %vm46 = vcmask 261120
    %v48 = vsel %vm46, 1.0, 0
    %v51 = vsel %vm46, %v44, 0
    %v54 = vsel %vm46, %v45, 0
    %56 = vmatprep.subr.mxu0 0.0
    %v57 = vand.u32 %v51, 4294901760
    %58 = vmatpush1.xpose.msra.mxu0 %v57
    %59 = vmatprep.subr.mxu0 0.0
    %v60 = vand.u32 %v54, 4294901760
    %61 = vmatpush1.xpose.msra.mxu0 %v60
    %62 = vmatprep.subr.mxu0 0.0
    %63 = vmatpush1.xpose.msra.mxu0 0.0
    %64 = vmatprep.subr.mxu0 0.0
    %65 = vmatpush1.xpose.msra.mxu0 0.0
    %66 = vmatprep.subr.mxu0 0.0
    %67 = vmatpush1.xpose.msra.mxu0 0.0
    %68 = vmatprep.subr.mxu0 0.0
    %69 = vmatpush1.xpose.msra.mxu0 0.0
    %70 = vmatprep.subr.mxu0 0.0
    %71 = vmatpush1.xpose.msra.mxu0 0.0
    %72 = vmatprep.subr.mxu0 0.0
    %73 = vmatpush1.xpose.msra.mxu0 0.0
    %74 = vmatprep.subr.mxu0 0.0
    %75 = vmatpush1.xpose.msra.mxu0 0.0
    %76 = vmatprep.subr.mxu0 0.0
    %77 = vmatpush1.xpose.msra.mxu0 0.0
    %78 = vmatprep.subr.mxu0 0.0
    %79 = vmatpush1.xpose.msra.mxu0 0.0
    %80 = vmatprep.subr.mxu0 0.0
    %81 = vmatpush1.xpose.msra.mxu0 0.0
    %82 = vmatprep.subr.mxu0 0.0
    %83 = vmatpush1.xpose.msra.mxu0 0.0
    %84 = vmatprep.subr.mxu0 0.0
    %85 = vmatpush1.xpose.msra.mxu0 0.0
    %86 = vmatprep.subr.mxu0 0.0
    %87 = vmatpush1.xpose.msra.mxu0 0.0
    %88 = vmatprep.subr.mxu0 0.0
    %89 = vmatpush1.xpose.msra.mxu0 0.0
    %90 = vmatprep.subr.mxu0 0.0
    %91 = vmatpush1.xpose.msra.mxu0 0.0
    %92 = vmatprep.subr.mxu0 0.0
    %93 = vmatpush1.xpose.msra.mxu0 0.0
    %94 = vmatprep.subr.mxu0 0.0
    %95 = vmatpush1.xpose.msra.mxu0 0.0
    %96 = vmatprep.subr.mxu0 0.0
    %97 = vmatpush1.xpose.msra.mxu0 0.0
    %98 = vmatprep.subr.mxu0 0.0
    %99 = vmatpush1.xpose.msra.mxu0 0.0
    %100 = vmatprep.subr.mxu0 0.0
    %101 = vmatpush1.xpose.msra.mxu0 0.0
    %102 = vmatprep.subr.mxu0 0.0
    %103 = vmatpush1.xpose.msra.mxu0 0.0
    %104 = vmatprep.subr.mxu0 0.0
    %105 = vmatpush1.xpose.msra.mxu0 0.0
    %106 = vmatprep.subr.mxu0 0.0
    %107 = vmatpush1.xpose.msra.mxu0 0.0
    %108 = vmatprep.subr.mxu0 0.0
    %109 = vmatpush1.xpose.msra.mxu0 0.0
    %110 = vmatprep.subr.mxu0 0.0
    %111 = vmatpush1.xpose.msra.mxu0 0.0
    %112 = vmatprep.subr.mxu0 0.0
    %113 = vmatpush1.xpose.msra.mxu0 0.0
    %114 = vmatprep.subr.mxu0 0.0
    %115 = vmatpush1.xpose.msra.mxu0 0.0
    %116 = vmatprep.subr.mxu0 0.0
    %117 = vmatpush1.xpose.msra.mxu0 0.0
    %118 = vmatprep.subr.mxu0 0.0
    %119 = vmatpush1.xpose.msra.mxu0 0.0
    %120 = vmatprep.subr.mxu0 0.0
    %121 = vmatpush1.xpose.msra.mxu0 0.0
    %122 = vmatprep.mubr.f32.mxu0 0.0
    %v123 = vand.u32 %v48, 4294901760
    %v124 = vsub.f32 %v48, %v123
    %v125 = vand.u32 %v124, 4294901760
    %v126 = vsub.f32 %v124, %v125
    %v127 = vand.u32 %v126, 4294901760
    %128 = vmatmul.mubr.f32.gmra.mrb[0].mxu0 %v127
    %v129 = vpop.f32.mrb[0].mxu0
    %v130 = vadd.f32 0.0, %v129
    %v131 = vpop.f32.mrb[0].mxu0
    %132 = vdwg.mxu0
    %133 = vmatprep.subr.mxu0 0.0
    %v134 = vand.u32 %v51, 4294901760
    %v135 = vsub.f32 %v51, %v134
    %v136 = vand.u32 %v135, 4294901760
    %v137 = vsub.f32 %v135, %v136
    %v138 = vand.u32 %v137, 4294901760
    %139 = vmatpush1.xpose.msra.mxu0 %v138
    %140 = vmatprep.subr.mxu0 0.0
    %v141 = vand.u32 %v54, 4294901760
    %v142 = vsub.f32 %v54, %v141
    %v143 = vand.u32 %v142, 4294901760
    %v144 = vsub.f32 %v142, %v143
    %v145 = vand.u32 %v144, 4294901760
    %146 = vmatpush1.xpose.msra.mxu0 %v145
    %147 = vmatprep.subr.mxu0 0.0
    %148 = vmatpush1.xpose.msra.mxu0 0.0
    %149 = vmatprep.subr.mxu0 0.0
    %150 = vmatpush1.xpose.msra.mxu0 0.0
    %151 = vmatprep.subr.mxu0 0.0
    %152 = vmatpush1.xpose.msra.mxu0 0.0
    %153 = vmatprep.subr.mxu0 0.0
    %154 = vmatpush1.xpose.msra.mxu0 0.0
    %155 = vmatprep.subr.mxu0 0.0
    %156 = vmatpush1.xpose.msra.mxu0 0.0
    %157 = vmatprep.subr.mxu0 0.0
    %158 = vmatpush1.xpose.msra.mxu0 0.0
    %159 = vmatprep.subr.mxu0 0.0
    %160 = vmatpush1.xpose.msra.mxu0 0.0
    %161 = vmatprep.subr.mxu0 0.0
    %162 = vmatpush1.xpose.msra.mxu0 0.0
    %163 = vmatprep.subr.mxu0 0.0
    %164 = vmatpush1.xpose.msra.mxu0 0.0
    %165 = vmatprep.subr.mxu0 0.0
    %166 = vmatpush1.xpose.msra.mxu0 0.0
    %167 = vmatprep.subr.mxu0 0.0
    %168 = vmatpush1.xpose.msra.mxu0 0.0
    %169 = vmatprep.subr.mxu0 0.0
    %170 = vmatpush1.xpose.msra.mxu0 0.0
    %171 = vmatprep.subr.mxu0 0.0
    %172 = vmatpush1.xpose.msra.mxu0 0.0
    %173 = vmatprep.subr.mxu0 0.0
    %174 = vmatpush1.xpose.msra.mxu0 0.0
    %175 = vmatprep.subr.mxu0 0.0
    %176 = vmatpush1.xpose.msra.mxu0 0.0
    %177 = vmatprep.subr.mxu0 0.0
    %178 = vmatpush1.xpose.msra.mxu0 0.0
    %179 = vmatprep.subr.mxu0 0.0
    %180 = vmatpush1.xpose.msra.mxu0 0.0
    %181 = vmatprep.subr.mxu0 0.0
    %182 = vmatpush1.xpose.msra.mxu0 0.0
    %183 = vmatprep.subr.mxu0 0.0
    %184 = vmatpush1.xpose.msra.mxu0 0.0
    %185 = vmatprep.subr.mxu0 0.0
    %186 = vmatpush1.xpose.msra.mxu0 0.0
    %187 = vmatprep.subr.mxu0 0.0
    %188 = vmatpush1.xpose.msra.mxu0 0.0
    %189 = vmatprep.subr.mxu0 0.0
    %190 = vmatpush1.xpose.msra.mxu0 0.0
    %191 = vmatprep.subr.mxu0 0.0
    %192 = vmatpush1.xpose.msra.mxu0 0.0
    %193 = vmatprep.subr.mxu0 0.0
    %194 = vmatpush1.xpose.msra.mxu0 0.0
    %195 = vmatprep.subr.mxu0 0.0
    %196 = vmatpush1.xpose.msra.mxu0 0.0
    %197 = vmatprep.subr.mxu0 0.0
    %198 = vmatpush1.xpose.msra.mxu0 0.0
    %199 = vmatprep.subr.mxu0 0.0
    %200 = vmatpush1.xpose.msra.mxu0 0.0
    %201 = vmatprep.subr.mxu0 0.0
    %202 = vmatpush1.xpose.msra.mxu0 0.0
    %203 = vmatprep.subr.mxu0 0.0
    %204 = vmatpush1.xpose.msra.mxu0 0.0
    %205 = vmatprep.subr.mxu0 0.0
    %206 = vmatpush1.xpose.msra.mxu0 0.0
    %207 = vmatprep.mubr.f32.mxu0 0.0
    %v208 = vand.u32 %v48, 4294901760
    %209 = vmatmul.mubr.f32.gmra.mrb[0].mxu0 %v208
    %v210 = vpop.f32.mrb[0].mxu0
    %v211 = vadd.f32 %v130, %v210
    %v212 = vpop.f32.mrb[0].mxu0
    %213 = vdwg.mxu0
    %214 = vmatprep.subr.mxu0 0.0
    %v215 = vand.u32 %v51, 4294901760
    %v216 = vsub.f32 %v51, %v215
    %217 = vmatpush1.xpose.msra.mxu0 %v216
    %218 = vmatprep.subr.mxu0 0.0
    %v219 = vand.u32 %v54, 4294901760
    %v220 = vsub.f32 %v54, %v219
    %221 = vmatpush1.xpose.msra.mxu0 %v220
    %222 = vmatprep.subr.mxu0 0.0
    %223 = vmatpush1.xpose.msra.mxu0 0.0
    %224 = vmatprep.subr.mxu0 0.0
    %225 = vmatpush1.xpose.msra.mxu0 0.0
    %226 = vmatprep.subr.mxu0 0.0
    %227 = vmatpush1.xpose.msra.mxu0 0.0
    %228 = vmatprep.subr.mxu0 0.0
    %229 = vmatpush1.xpose.msra.mxu0 0.0
    %230 = vmatprep.subr.mxu0 0.0
    %231 = vmatpush1.xpose.msra.mxu0 0.0
    %232 = vmatprep.subr.mxu0 0.0
    %233 = vmatpush1.xpose.msra.mxu0 0.0
    %234 = vmatprep.subr.mxu0 0.0
    %235 = vmatpush1.xpose.msra.mxu0 0.0
    %236 = vmatprep.subr.mxu0 0.0
    %237 = vmatpush1.xpose.msra.mxu0 0.0
    %238 = vmatprep.subr.mxu0 0.0
    %239 = vmatpush1.xpose.msra.mxu0 0.0
    %240 = vmatprep.subr.mxu0 0.0
    %241 = vmatpush1.xpose.msra.mxu0 0.0
    %242 = vmatprep.subr.mxu0 0.0
    %243 = vmatpush1.xpose.msra.mxu0 0.0
    %244 = vmatprep.subr.mxu0 0.0
    %245 = vmatpush1.xpose.msra.mxu0 0.0
    %246 = vmatprep.subr.mxu0 0.0
    %247 = vmatpush1.xpose.msra.mxu0 0.0
    %248 = vmatprep.subr.mxu0 0.0
    %249 = vmatpush1.xpose.msra.mxu0 0.0
    %250 = vmatprep.subr.mxu0 0.0
    %251 = vmatpush1.xpose.msra.mxu0 0.0
    %252 = vmatprep.subr.mxu0 0.0
    %253 = vmatpush1.xpose.msra.mxu0 0.0
    %254 = vmatprep.subr.mxu0 0.0
    %255 = vmatpush1.xpose.msra.mxu0 0.0
    %256 = vmatprep.subr.mxu0 0.0
    %257 = vmatpush1.xpose.msra.mxu0 0.0
    %258 = vmatprep.subr.mxu0 0.0
    %259 = vmatpush1.xpose.msra.mxu0 0.0
    %260 = vmatprep.subr.mxu0 0.0
    %261 = vmatpush1.xpose.msra.mxu0 0.0
    %262 = vmatprep.subr.mxu0 0.0
    %263 = vmatpush1.xpose.msra.mxu0 0.0
    %264 = vmatprep.subr.mxu0 0.0
    %265 = vmatpush1.xpose.msra.mxu0 0.0
    %266 = vmatprep.subr.mxu0 0.0
    %267 = vmatpush1.xpose.msra.mxu0 0.0
    %268 = vmatprep.subr.mxu0 0.0
    %269 = vmatpush1.xpose.msra.mxu0 0.0
    %270 = vmatprep.subr.mxu0 0.0
    %271 = vmatpush1.xpose.msra.mxu0 0.0
    %272 = vmatprep.subr.mxu0 0.0
    %273 = vmatpush1.xpose.msra.mxu0 0.0
    %274 = vmatprep.subr.mxu0 0.0
    %275 = vmatpush1.xpose.msra.mxu0 0.0
    %276 = vmatprep.subr.mxu0 0.0
    %277 = vmatpush1.xpose.msra.mxu0 0.0
    %278 = vmatprep.subr.mxu0 0.0
    %279 = vmatpush1.xpose.msra.mxu0 0.0
    %280 = vmatprep.subr.mxu0 0.0
    %281 = vmatpush1.xpose.msra.mxu0 0.0
    %282 = vmatprep.mubr.f32.mxu0 0.0
    %v283 = vand.u32 %v48, 4294901760
    %v284 = vsub.f32 %v48, %v283
    %285 = vmatmul.mubr.f32.gmra.mrb[0].mxu0 %v284
    %v286 = vpop.f32.mrb[0].mxu0
    %v287 = vadd.f32 %v211, %v286
    %v288 = vpop.f32.mrb[0].mxu0
    %289 = vdwg.mxu0
    %290 = vmatprep.subr.mxu0 0.0
    %v291 = vand.u32 %v51, 4294901760
    %292 = vmatpush1.xpose.msra.mxu0 %v291
    %293 = vmatprep.subr.mxu0 0.0
    %v294 = vand.u32 %v54, 4294901760
    %295 = vmatpush1.xpose.msra.mxu0 %v294
    %296 = vmatprep.subr.mxu0 0.0
    %297 = vmatpush1.xpose.msra.mxu0 0.0
    %298 = vmatprep.subr.mxu0 0.0
    %299 = vmatpush1.xpose.msra.mxu0 0.0
    %300 = vmatprep.subr.mxu0 0.0
    %301 = vmatpush1.xpose.msra.mxu0 0.0
    %302 = vmatprep.subr.mxu0 0.0
    %303 = vmatpush1.xpose.msra.mxu0 0.0
    %304 = vmatprep.subr.mxu0 0.0
    %305 = vmatpush1.xpose.msra.mxu0 0.0
    %306 = vmatprep.subr.mxu0 0.0
    %307 = vmatpush1.xpose.msra.mxu0 0.0
    %308 = vmatprep.subr.mxu0 0.0
    %309 = vmatpush1.xpose.msra.mxu0 0.0
    %310 = vmatprep.subr.mxu0 0.0
    %311 = vmatpush1.xpose.msra.mxu0 0.0
    %312 = vmatprep.subr.mxu0 0.0
    %313 = vmatpush1.xpose.msra.mxu0 0.0
    %314 = vmatprep.subr.mxu0 0.0
    %315 = vmatpush1.xpose.msra.mxu0 0.0
    %316 = vmatprep.subr.mxu0 0.0
    %317 = vmatpush1.xpose.msra.mxu0 0.0
    %318 = vmatprep.subr.mxu0 0.0
    %319 = vmatpush1.xpose.msra.mxu0 0.0
    %320 = vmatprep.subr.mxu0 0.0
    %321 = vmatpush1.xpose.msra.mxu0 0.0
    %322 = vmatprep.subr.mxu0 0.0
    %323 = vmatpush1.xpose.msra.mxu0 0.0
    %324 = vmatprep.subr.mxu0 0.0
    %325 = vmatpush1.xpose.msra.mxu0 0.0
    %326 = vmatprep.subr.mxu0 0.0
    %327 = vmatpush1.xpose.msra.mxu0 0.0
    %328 = vmatprep.subr.mxu0 0.0
    %329 = vmatpush1.xpose.msra.mxu0 0.0
    %330 = vmatprep.subr.mxu0 0.0
    %331 = vmatpush1.xpose.msra.mxu0 0.0
    %332 = vmatprep.subr.mxu0 0.0
    %333 = vmatpush1.xpose.msra.mxu0 0.0
    %334 = vmatprep.subr.mxu0 0.0
    %335 = vmatpush1.xpose.msra.mxu0 0.0
    %336 = vmatprep.subr.mxu0 0.0
    %337 = vmatpush1.xpose.msra.mxu0 0.0
    %338 = vmatprep.subr.mxu0 0.0
    %339 = vmatpush1.xpose.msra.mxu0 0.0
    %340 = vmatprep.subr.mxu0 0.0
    %341 = vmatpush1.xpose.msra.mxu0 0.0
    %342 = vmatprep.subr.mxu0 0.0
    %343 = vmatpush1.xpose.msra.mxu0 0.0
    %344 = vmatprep.subr.mxu0 0.0
    %345 = vmatpush1.xpose.msra.mxu0 0.0
    %346 = vmatprep.subr.mxu0 0.0
    %347 = vmatpush1.xpose.msra.mxu0 0.0
    %348 = vmatprep.subr.mxu0 0.0
    %349 = vmatpush1.xpose.msra.mxu0 0.0
    %350 = vmatprep.subr.mxu0 0.0
    %351 = vmatpush1.xpose.msra.mxu0 0.0
    %352 = vmatprep.subr.mxu0 0.0
    %353 = vmatpush1.xpose.msra.mxu0 0.0
    %354 = vmatprep.subr.mxu0 0.0
    %355 = vmatpush1.xpose.msra.mxu0 0.0
    %356 = vmatprep.mubr.f32.mxu0 0.0
    %v357 = vand.u32 %v48, 4294901760
    %v358 = vsub.f32 %v48, %v357
    %v359 = vand.u32 %v358, 4294901760
    %360 = vmatmul.mubr.f32.gmra.mrb[0].mxu0 %v359
    %v361 = vpop.f32.mrb[0].mxu0
    %v362 = vadd.f32 %v287, %v361
    %v363 = vpop.f32.mrb[0].mxu0
    %364 = vdwg.mxu0
    %365 = vmatprep.subr.mxu0 0.0
    %v366 = vand.u32 %v51, 4294901760
    %v367 = vsub.f32 %v51, %v366
    %v368 = vand.u32 %v367, 4294901760
    %369 = vmatpush1.xpose.msra.mxu0 %v368
    %370 = vmatprep.subr.mxu0 0.0
    %v371 = vand.u32 %v54, 4294901760
    %v372 = vsub.f32 %v54, %v371
    %v373 = vand.u32 %v372, 4294901760
    %374 = vmatpush1.xpose.msra.mxu0 %v373
    %375 = vmatprep.subr.mxu0 0.0
    %376 = vmatpush1.xpose.msra.mxu0 0.0
    %377 = vmatprep.subr.mxu0 0.0
    %378 = vmatpush1.xpose.msra.mxu0 0.0
    %379 = vmatprep.subr.mxu0 0.0
    %380 = vmatpush1.xpose.msra.mxu0 0.0
    %381 = vmatprep.subr.mxu0 0.0
    %382 = vmatpush1.xpose.msra.mxu0 0.0
    %383 = vmatprep.subr.mxu0 0.0
    %384 = vmatpush1.xpose.msra.mxu0 0.0
    %385 = vmatprep.subr.mxu0 0.0
    %386 = vmatpush1.xpose.msra.mxu0 0.0
    %387 = vmatprep.subr.mxu0 0.0
    %388 = vmatpush1.xpose.msra.mxu0 0.0
    %389 = vmatprep.subr.mxu0 0.0
    %390 = vmatpush1.xpose.msra.mxu0 0.0
    %391 = vmatprep.subr.mxu0 0.0
    %392 = vmatpush1.xpose.msra.mxu0 0.0
    %393 = vmatprep.subr.mxu0 0.0
    %394 = vmatpush1.xpose.msra.mxu0 0.0
    %395 = vmatprep.subr.mxu0 0.0
    %396 = vmatpush1.xpose.msra.mxu0 0.0
    %397 = vmatprep.subr.mxu0 0.0
    %398 = vmatpush1.xpose.msra.mxu0 0.0
    %399 = vmatprep.subr.mxu0 0.0
    %400 = vmatpush1.xpose.msra.mxu0 0.0
    %401 = vmatprep.subr.mxu0 0.0
    %402 = vmatpush1.xpose.msra.mxu0 0.0
    %403 = vmatprep.subr.mxu0 0.0
    %404 = vmatpush1.xpose.msra.mxu0 0.0
    %405 = vmatprep.subr.mxu0 0.0
    %406 = vmatpush1.xpose.msra.mxu0 0.0
    %407 = vmatprep.subr.mxu0 0.0
    %408 = vmatpush1.xpose.msra.mxu0 0.0
    %409 = vmatprep.subr.mxu0 0.0
    %410 = vmatpush1.xpose.msra.mxu0 0.0
    %411 = vmatprep.subr.mxu0 0.0
    %412 = vmatpush1.xpose.msra.mxu0 0.0
    %413 = vmatprep.subr.mxu0 0.0
    %414 = vmatpush1.xpose.msra.mxu0 0.0
    %415 = vmatprep.subr.mxu0 0.0
    %416 = vmatpush1.xpose.msra.mxu0 0.0
    %417 = vmatprep.subr.mxu0 0.0
    %418 = vmatpush1.xpose.msra.mxu0 0.0
    %419 = vmatprep.subr.mxu0 0.0
    %420 = vmatpush1.xpose.msra.mxu0 0.0
    %421 = vmatprep.subr.mxu0 0.0
    %422 = vmatpush1.xpose.msra.mxu0 0.0
    %423 = vmatprep.subr.mxu0 0.0
    %424 = vmatpush1.xpose.msra.mxu0 0.0
    %425 = vmatprep.subr.mxu0 0.0
    %426 = vmatpush1.xpose.msra.mxu0 0.0
    %427 = vmatprep.subr.mxu0 0.0
    %428 = vmatpush1.xpose.msra.mxu0 0.0
    %429 = vmatprep.subr.mxu0 0.0
    %430 = vmatpush1.xpose.msra.mxu0 0.0
    %431 = vmatprep.subr.mxu0 0.0
    %432 = vmatpush1.xpose.msra.mxu0 0.0
    %433 = vmatprep.subr.mxu0 0.0
    %434 = vmatpush1.xpose.msra.mxu0 0.0
    %435 = vmatprep.mubr.f32.mxu0 0.0
    %v436 = vand.u32 %v48, 4294901760
    %437 = vmatmul.mubr.f32.gmra.mrb[0].mxu0 %v436
    %v438 = vpop.f32.mrb[0].mxu0
    %v439 = vadd.f32 %v362, %v438
    %v440 = vpop.f32.mrb[0].mxu0
    %441 = vdwg.mxu0
    %442 = vmatprep.subr.mxu0 0.0
    %v443 = vand.u32 %v51, 4294901760
    %444 = vmatpush1.xpose.msra.mxu0 %v443
    %445 = vmatprep.subr.mxu0 0.0
    %v446 = vand.u32 %v54, 4294901760
    %447 = vmatpush1.xpose.msra.mxu0 %v446
    %448 = vmatprep.subr.mxu0 0.0
    %449 = vmatpush1.xpose.msra.mxu0 0.0
    %450 = vmatprep.subr.mxu0 0.0
    %451 = vmatpush1.xpose.msra.mxu0 0.0
    %452 = vmatprep.subr.mxu0 0.0
    %453 = vmatpush1.xpose.msra.mxu0 0.0
    %454 = vmatprep.subr.mxu0 0.0
    %455 = vmatpush1.xpose.msra.mxu0 0.0
    %456 = vmatprep.subr.mxu0 0.0
    %457 = vmatpush1.xpose.msra.mxu0 0.0
    %458 = vmatprep.subr.mxu0 0.0
    %459 = vmatpush1.xpose.msra.mxu0 0.0
    %460 = vmatprep.subr.mxu0 0.0
    %461 = vmatpush1.xpose.msra.mxu0 0.0
    %462 = vmatprep.subr.mxu0 0.0
    %463 = vmatpush1.xpose.msra.mxu0 0.0
    %464 = vmatprep.subr.mxu0 0.0
    %465 = vmatpush1.xpose.msra.mxu0 0.0
    %466 = vmatprep.subr.mxu0 0.0
    %467 = vmatpush1.xpose.msra.mxu0 0.0
    %468 = vmatprep.subr.mxu0 0.0
    %469 = vmatpush1.xpose.msra.mxu0 0.0
    %470 = vmatprep.subr.mxu0 0.0
    %471 = vmatpush1.xpose.msra.mxu0 0.0
    %472 = vmatprep.subr.mxu0 0.0
    %473 = vmatpush1.xpose.msra.mxu0 0.0
    %474 = vmatprep.subr.mxu0 0.0
    %475 = vmatpush1.xpose.msra.mxu0 0.0
    %476 = vmatprep.subr.mxu0 0.0
    %477 = vmatpush1.xpose.msra.mxu0 0.0
    %478 = vmatprep.subr.mxu0 0.0
    %479 = vmatpush1.xpose.msra.mxu0 0.0
    %480 = vmatprep.subr.mxu0 0.0
    %481 = vmatpush1.xpose.msra.mxu0 0.0
    %482 = vmatprep.subr.mxu0 0.0
    %483 = vmatpush1.xpose.msra.mxu0 0.0
    %484 = vmatprep.subr.mxu0 0.0
    %485 = vmatpush1.xpose.msra.mxu0 0.0
    %486 = vmatprep.subr.mxu0 0.0
    %487 = vmatpush1.xpose.msra.mxu0 0.0
    %488 = vmatprep.subr.mxu0 0.0
    %489 = vmatpush1.xpose.msra.mxu0 0.0
    %490 = vmatprep.subr.mxu0 0.0
    %491 = vmatpush1.xpose.msra.mxu0 0.0
    %492 = vmatprep.subr.mxu0 0.0
    %493 = vmatpush1.xpose.msra.mxu0 0.0
    %494 = vmatprep.subr.mxu0 0.0
    %495 = vmatpush1.xpose.msra.mxu0 0.0
    %496 = vmatprep.subr.mxu0 0.0
    %497 = vmatpush1.xpose.msra.mxu0 0.0
    %498 = vmatprep.subr.mxu0 0.0
    %499 = vmatpush1.xpose.msra.mxu0 0.0
    %500 = vmatprep.subr.mxu0 0.0
    %501 = vmatpush1.xpose.msra.mxu0 0.0
    %502 = vmatprep.subr.mxu0 0.0
    %503 = vmatpush1.xpose.msra.mxu0 0.0
    %504 = vmatprep.subr.mxu0 0.0
    %505 = vmatpush1.xpose.msra.mxu0 0.0
    %506 = vmatprep.subr.mxu0 0.0
    %507 = vmatpush1.xpose.msra.mxu0 0.0
    %508 = vmatprep.mubr.f32.mxu0 0.0
    %v509 = vand.u32 %v48, 4294901760
    %510 = vmatmul.mubr.f32.gmra.mrb[0].mxu0 %v509
    %v511 = vpop.f32.mrb[0].mxu0
    %v512 = vadd.f32 %v439, %v511
    %v513 = vpop.f32.mrb[0].mxu0
    %514 = vdwg.mxu0
    %v515 = vmul.f32 %v40, %v40
    %v516 = vmul.f32 %v41, %v41
    %v518 = vsel %vm46, %v515, 0
    %v521 = vsel %vm46, %v516, 0
    %523 = vmatprep.subr.mxu0 0.0
    %v524 = vand.u32 %v518, 4294901760
    %525 = vmatpush1.xpose.msra.mxu0 %v524
    %526 = vmatprep.subr.mxu0 0.0
    %v527 = vand.u32 %v521, 4294901760
    %528 = vmatpush1.xpose.msra.mxu0 %v527
    %529 = vmatprep.subr.mxu0 0.0
    %530 = vmatpush1.xpose.msra.mxu0 0.0
    %531 = vmatprep.subr.mxu0 0.0
    %532 = vmatpush1.xpose.msra.mxu0 0.0
    %533 = vmatprep.subr.mxu0 0.0
    %534 = vmatpush1.xpose.msra.mxu0 0.0
    %535 = vmatprep.subr.mxu0 0.0
    %536 = vmatpush1.xpose.msra.mxu0 0.0
    %537 = vmatprep.subr.mxu0 0.0
    %538 = vmatpush1.xpose.msra.mxu0 0.0
    %539 = vmatprep.subr.mxu0 0.0
    %540 = vmatpush1.xpose.msra.mxu0 0.0
    %541 = vmatprep.subr.mxu0 0.0
    %542 = vmatpush1.xpose.msra.mxu0 0.0
    %543 = vmatprep.subr.mxu0 0.0
    %544 = vmatpush1.xpose.msra.mxu0 0.0
    %545 = vmatprep.subr.mxu0 0.0
    %546 = vmatpush1.xpose.msra.mxu0 0.0
    %547 = vmatprep.subr.mxu0 0.0
    %548 = vmatpush1.xpose.msra.mxu0 0.0
    %549 = vmatprep.subr.mxu0 0.0
    %550 = vmatpush1.xpose.msra.mxu0 0.0
    %551 = vmatprep.subr.mxu0 0.0
    %552 = vmatpush1.xpose.msra.mxu0 0.0
    %553 = vmatprep.subr.mxu0 0.0
    %554 = vmatpush1.xpose.msra.mxu0 0.0
    %555 = vmatprep.subr.mxu0 0.0
    %556 = vmatpush1.xpose.msra.mxu0 0.0
    %557 = vmatprep.subr.mxu0 0.0
    %558 = vmatpush1.xpose.msra.mxu0 0.0
    %559 = vmatprep.subr.mxu0 0.0
    %560 = vmatpush1.xpose.msra.mxu0 0.0
    %561 = vmatprep.subr.mxu0 0.0
    %562 = vmatpush1.xpose.msra.mxu0 0.0
    %563 = vmatprep.subr.mxu0 0.0
    %564 = vmatpush1.xpose.msra.mxu0 0.0
    %565 = vmatprep.subr.mxu0 0.0
    %566 = vmatpush1.xpose.msra.mxu0 0.0
    %567 = vmatprep.subr.mxu0 0.0
    %568 = vmatpush1.xpose.msra.mxu0 0.0
    %569 = vmatprep.subr.mxu0 0.0
    %570 = vmatpush1.xpose.msra.mxu0 0.0
    %571 = vmatprep.subr.mxu0 0.0
    %572 = vmatpush1.xpose.msra.mxu0 0.0
    %573 = vmatprep.subr.mxu0 0.0
    %574 = vmatpush1.xpose.msra.mxu0 0.0
    %575 = vmatprep.subr.mxu0 0.0
    %576 = vmatpush1.xpose.msra.mxu0 0.0
    %577 = vmatprep.subr.mxu0 0.0
    %578 = vmatpush1.xpose.msra.mxu0 0.0
    %579 = vmatprep.subr.mxu0 0.0
    %580 = vmatpush1.xpose.msra.mxu0 0.0
    %581 = vmatprep.subr.mxu0 0.0
    %582 = vmatpush1.xpose.msra.mxu0 0.0
    %583 = vmatprep.subr.mxu0 0.0
    %584 = vmatpush1.xpose.msra.mxu0 0.0
    %585 = vmatprep.subr.mxu0 0.0
    %586 = vmatpush1.xpose.msra.mxu0 0.0
    %587 = vmatprep.subr.mxu0 0.0
    %588 = vmatpush1.xpose.msra.mxu0 0.0
    %589 = vmatprep.mubr.f32.mxu0 0.0
    %v590 = vand.u32 %v48, 4294901760
    %v591 = vsub.f32 %v48, %v590
    %v592 = vand.u32 %v591, 4294901760
    %v593 = vsub.f32 %v591, %v592
    %v594 = vand.u32 %v593, 4294901760
    %595 = vmatmul.mubr.f32.gmra.mrb[0].mxu0 %v594
    %v596 = vpop.f32.mrb[0].mxu0
    %v597 = vadd.f32 0.0, %v596
    %v598 = vpop.f32.mrb[0].mxu0
    %599 = vdwg.mxu0
    %600 = vmatprep.subr.mxu0 0.0
    %v601 = vand.u32 %v518, 4294901760
    %v602 = vsub.f32 %v518, %v601
    %v603 = vand.u32 %v602, 4294901760
    %v604 = vsub.f32 %v602, %v603
    %v605 = vand.u32 %v604, 4294901760
    %606 = vmatpush1.xpose.msra.mxu0 %v605
    %607 = vmatprep.subr.mxu0 0.0
    %v608 = vand.u32 %v521, 4294901760
    %v609 = vsub.f32 %v521, %v608
    %v610 = vand.u32 %v609, 4294901760
    %v611 = vsub.f32 %v609, %v610
    %v612 = vand.u32 %v611, 4294901760
    %613 = vmatpush1.xpose.msra.mxu0 %v612
    %614 = vmatprep.subr.mxu0 0.0
    %615 = vmatpush1.xpose.msra.mxu0 0.0
    %616 = vmatprep.subr.mxu0 0.0
    %617 = vmatpush1.xpose.msra.mxu0 0.0
    %618 = vmatprep.subr.mxu0 0.0
    %619 = vmatpush1.xpose.msra.mxu0 0.0
    %620 = vmatprep.subr.mxu0 0.0
    %621 = vmatpush1.xpose.msra.mxu0 0.0
    %622 = vmatprep.subr.mxu0 0.0
    %623 = vmatpush1.xpose.msra.mxu0 0.0
    %624 = vmatprep.subr.mxu0 0.0
    %625 = vmatpush1.xpose.msra.mxu0 0.0
    %626 = vmatprep.subr.mxu0 0.0
    %627 = vmatpush1.xpose.msra.mxu0 0.0
    %628 = vmatprep.subr.mxu0 0.0
    %629 = vmatpush1.xpose.msra.mxu0 0.0
    %630 = vmatprep.subr.mxu0 0.0
    %631 = vmatpush1.xpose.msra.mxu0 0.0
    %632 = vmatprep.subr.mxu0 0.0
    %633 = vmatpush1.xpose.msra.mxu0 0.0
    %634 = vmatprep.subr.mxu0 0.0
    %635 = vmatpush1.xpose.msra.mxu0 0.0
    %636 = vmatprep.subr.mxu0 0.0
    %637 = vmatpush1.xpose.msra.mxu0 0.0
    %638 = vmatprep.subr.mxu0 0.0
    %639 = vmatpush1.xpose.msra.mxu0 0.0
    %640 = vmatprep.subr.mxu0 0.0
    %641 = vmatpush1.xpose.msra.mxu0 0.0
    %642 = vmatprep.subr.mxu0 0.0
    %643 = vmatpush1.xpose.msra.mxu0 0.0
    %644 = vmatprep.subr.mxu0 0.0
    %645 = vmatpush1.xpose.msra.mxu0 0.0
    %646 = vmatprep.subr.mxu0 0.0
    %647 = vmatpush1.xpose.msra.mxu0 0.0
    %648 = vmatprep.subr.mxu0 0.0
    %649 = vmatpush1.xpose.msra.mxu0 0.0
    %650 = vmatprep.subr.mxu0 0.0
    %651 = vmatpush1.xpose.msra.mxu0 0.0
    %652 = vmatprep.subr.mxu0 0.0
    %653 = vmatpush1.xpose.msra.mxu0 0.0
    %654 = vmatprep.subr.mxu0 0.0
    %655 = vmatpush1.xpose.msra.mxu0 0.0
    %656 = vmatprep.subr.mxu0 0.0
    %657 = vmatpush1.xpose.msra.mxu0 0.0
    %658 = vmatprep.subr.mxu0 0.0
    %659 = vmatpush1.xpose.msra.mxu0 0.0
    %660 = vmatprep.subr.mxu0 0.0
    %661 = vmatpush1.xpose.msra.mxu0 0.0
    %662 = vmatprep.subr.mxu0 0.0
    %663 = vmatpush1.xpose.msra.mxu0 0.0
    %664 = vmatprep.subr.mxu0 0.0
    %665 = vmatpush1.xpose.msra.mxu0 0.0
    %666 = vmatprep.subr.mxu0 0.0
    %667 = vmatpush1.xpose.msra.mxu0 0.0
    %668 = vmatprep.subr.mxu0 0.0
    %669 = vmatpush1.xpose.msra.mxu0 0.0
    %670 = vmatprep.subr.mxu0 0.0
    %671 = vmatpush1.xpose.msra.mxu0 0.0
    %672 = vmatprep.subr.mxu0 0.0
    %673 = vmatpush1.xpose.msra.mxu0 0.0
    %674 = vmatprep.mubr.f32.mxu0 0.0
    %v675 = vand.u32 %v48, 4294901760
    %676 = vmatmul.mubr.f32.gmra.mrb[0].mxu0 %v675
    %v677 = vpop.f32.mrb[0].mxu0
    %v678 = vadd.f32 %v597, %v677
    %v679 = vpop.f32.mrb[0].mxu0
    %680 = vdwg.mxu0
    %681 = vmatprep.subr.mxu0 0.0
    %v682 = vand.u32 %v518, 4294901760
    %v683 = vsub.f32 %v518, %v682
    %684 = vmatpush1.xpose.msra.mxu0 %v683
    %685 = vmatprep.subr.mxu0 0.0
    %v686 = vand.u32 %v521, 4294901760
    %v687 = vsub.f32 %v521, %v686
    %688 = vmatpush1.xpose.msra.mxu0 %v687
    %689 = vmatprep.subr.mxu0 0.0
    %690 = vmatpush1.xpose.msra.mxu0 0.0
    %691 = vmatprep.subr.mxu0 0.0
    %692 = vmatpush1.xpose.msra.mxu0 0.0
    %693 = vmatprep.subr.mxu0 0.0
    %694 = vmatpush1.xpose.msra.mxu0 0.0
    %695 = vmatprep.subr.mxu0 0.0
    %696 = vmatpush1.xpose.msra.mxu0 0.0
    %697 = vmatprep.subr.mxu0 0.0
    %698 = vmatpush1.xpose.msra.mxu0 0.0
    %699 = vmatprep.subr.mxu0 0.0
    %700 = vmatpush1.xpose.msra.mxu0 0.0
    %701 = vmatprep.subr.mxu0 0.0
    %702 = vmatpush1.xpose.msra.mxu0 0.0
    %703 = vmatprep.subr.mxu0 0.0
    %704 = vmatpush1.xpose.msra.mxu0 0.0
    %705 = vmatprep.subr.mxu0 0.0
    %706 = vmatpush1.xpose.msra.mxu0 0.0
    %707 = vmatprep.subr.mxu0 0.0
    %708 = vmatpush1.xpose.msra.mxu0 0.0
    %709 = vmatprep.subr.mxu0 0.0
    %710 = vmatpush1.xpose.msra.mxu0 0.0
    %711 = vmatprep.subr.mxu0 0.0
    %712 = vmatpush1.xpose.msra.mxu0 0.0
    %713 = vmatprep.subr.mxu0 0.0
    %714 = vmatpush1.xpose.msra.mxu0 0.0
    %715 = vmatprep.subr.mxu0 0.0
    %716 = vmatpush1.xpose.msra.mxu0 0.0
    %717 = vmatprep.subr.mxu0 0.0
    %718 = vmatpush1.xpose.msra.mxu0 0.0
    %719 = vmatprep.subr.mxu0 0.0
    %720 = vmatpush1.xpose.msra.mxu0 0.0
    %721 = vmatprep.subr.mxu0 0.0
    %722 = vmatpush1.xpose.msra.mxu0 0.0
    %723 = vmatprep.subr.mxu0 0.0
    %724 = vmatpush1.xpose.msra.mxu0 0.0
    %725 = vmatprep.subr.mxu0 0.0
    %726 = vmatpush1.xpose.msra.mxu0 0.0
    %727 = vmatprep.subr.mxu0 0.0
    %728 = vmatpush1.xpose.msra.mxu0 0.0
    %729 = vmatprep.subr.mxu0 0.0
    %730 = vmatpush1.xpose.msra.mxu0 0.0
    %731 = vmatprep.subr.mxu0 0.0
    %732 = vmatpush1.xpose.msra.mxu0 0.0
    %733 = vmatprep.subr.mxu0 0.0
    %734 = vmatpush1.xpose.msra.mxu0 0.0
    %735 = vmatprep.subr.mxu0 0.0
    %736 = vmatpush1.xpose.msra.mxu0 0.0
    %737 = vmatprep.subr.mxu0 0.0
    %738 = vmatpush1.xpose.msra.mxu0 0.0
    %739 = vmatprep.subr.mxu0 0.0
    %740 = vmatpush1.xpose.msra.mxu0 0.0
    %741 = vmatprep.subr.mxu0 0.0
    %742 = vmatpush1.xpose.msra.mxu0 0.0
    %743 = vmatprep.subr.mxu0 0.0
    %744 = vmatpush1.xpose.msra.mxu0 0.0
    %745 = vmatprep.subr.mxu0 0.0
    %746 = vmatpush1.xpose.msra.mxu0 0.0
    %747 = vmatprep.subr.mxu0 0.0
    %748 = vmatpush1.xpose.msra.mxu0 0.0
    %749 = vmatprep.mubr.f32.mxu0 0.0
    %v750 = vand.u32 %v48, 4294901760
    %v751 = vsub.f32 %v48, %v750
    %752 = vmatmul.mubr.f32.gmra.mrb[0].mxu0 %v751
    %v753 = vpop.f32.mrb[0].mxu0
    %v754 = vadd.f32 %v678, %v753
    %v755 = vpop.f32.mrb[0].mxu0
    %756 = vdwg.mxu0
    %757 = vmatprep.subr.mxu0 0.0
    %v758 = vand.u32 %v518, 4294901760
    %759 = vmatpush1.xpose.msra.mxu0 %v758
    %760 = vmatprep.subr.mxu0 0.0
    %v761 = vand.u32 %v521, 4294901760
    %762 = vmatpush1.xpose.msra.mxu0 %v761
    %763 = vmatprep.subr.mxu0 0.0
    %764 = vmatpush1.xpose.msra.mxu0 0.0
    %765 = vmatprep.subr.mxu0 0.0
    %766 = vmatpush1.xpose.msra.mxu0 0.0
    %767 = vmatprep.subr.mxu0 0.0
    %768 = vmatpush1.xpose.msra.mxu0 0.0
    %769 = vmatprep.subr.mxu0 0.0
    %770 = vmatpush1.xpose.msra.mxu0 0.0
    %771 = vmatprep.subr.mxu0 0.0
    %772 = vmatpush1.xpose.msra.mxu0 0.0
    %773 = vmatprep.subr.mxu0 0.0
    %774 = vmatpush1.xpose.msra.mxu0 0.0
    %775 = vmatprep.subr.mxu0 0.0
    %776 = vmatpush1.xpose.msra.mxu0 0.0
    %777 = vmatprep.subr.mxu0 0.0
    %778 = vmatpush1.xpose.msra.mxu0 0.0
    %779 = vmatprep.subr.mxu0 0.0
    %780 = vmatpush1.xpose.msra.mxu0 0.0
    %781 = vmatprep.subr.mxu0 0.0
    %782 = vmatpush1.xpose.msra.mxu0 0.0
    %783 = vmatprep.subr.mxu0 0.0
    %784 = vmatpush1.xpose.msra.mxu0 0.0
    %785 = vmatprep.subr.mxu0 0.0
    %786 = vmatpush1.xpose.msra.mxu0 0.0
    %787 = vmatprep.subr.mxu0 0.0
    %788 = vmatpush1.xpose.msra.mxu0 0.0
    %789 = vmatprep.subr.mxu0 0.0
    %790 = vmatpush1.xpose.msra.mxu0 0.0
    %791 = vmatprep.subr.mxu0 0.0
    %792 = vmatpush1.xpose.msra.mxu0 0.0
    %793 = vmatprep.subr.mxu0 0.0
    %794 = vmatpush1.xpose.msra.mxu0 0.0
    %795 = vmatprep.subr.mxu0 0.0
    %796 = vmatpush1.xpose.msra.mxu0 0.0
    %797 = vmatprep.subr.mxu0 0.0
    %798 = vmatpush1.xpose.msra.mxu0 0.0
    %799 = vmatprep.subr.mxu0 0.0
    %800 = vmatpush1.xpose.msra.mxu0 0.0
    %801 = vmatprep.subr.mxu0 0.0
    %802 = vmatpush1.xpose.msra.mxu0 0.0
    %803 = vmatprep.subr.mxu0 0.0
    %804 = vmatpush1.xpose.msra.mxu0 0.0
    %805 = vmatprep.subr.mxu0 0.0
    %806 = vmatpush1.xpose.msra.mxu0 0.0
    %807 = vmatprep.subr.mxu0 0.0
    %808 = vmatpush1.xpose.msra.mxu0 0.0
    %809 = vmatprep.subr.mxu0 0.0
    %810 = vmatpush1.xpose.msra.mxu0 0.0
    %811 = vmatprep.subr.mxu0 0.0
    %812 = vmatpush1.xpose.msra.mxu0 0.0
    %813 = vmatprep.subr.mxu0 0.0
    %814 = vmatpush1.xpose.msra.mxu0 0.0
    %815 = vmatprep.subr.mxu0 0.0
    %816 = vmatpush1.xpose.msra.mxu0 0.0
    %817 = vmatprep.subr.mxu0 0.0
    %818 = vmatpush1.xpose.msra.mxu0 0.0
    %819 = vmatprep.subr.mxu0 0.0
    %820 = vmatpush1.xpose.msra.mxu0 0.0
    %821 = vmatprep.subr.mxu0 0.0
    %822 = vmatpush1.xpose.msra.mxu0 0.0
    %823 = vmatprep.mubr.f32.mxu0 0.0
    %v824 = vand.u32 %v48, 4294901760
    %v825 = vsub.f32 %v48, %v824
    %v826 = vand.u32 %v825, 4294901760
    %827 = vmatmul.mubr.f32.gmra.mrb[0].mxu0 %v826
    %v828 = vpop.f32.mrb[0].mxu0
    %v829 = vadd.f32 %v754, %v828
    %v830 = vpop.f32.mrb[0].mxu0
    %831 = vdwg.mxu0
    %832 = vmatprep.subr.mxu0 0.0
    %v833 = vand.u32 %v518, 4294901760
    %v834 = vsub.f32 %v518, %v833
    %v835 = vand.u32 %v834, 4294901760
    %836 = vmatpush1.xpose.msra.mxu0 %v835
    %837 = vmatprep.subr.mxu0 0.0
    %v838 = vand.u32 %v521, 4294901760
    %v839 = vsub.f32 %v521, %v838
    %v840 = vand.u32 %v839, 4294901760
    %841 = vmatpush1.xpose.msra.mxu0 %v840
    %842 = vmatprep.subr.mxu0 0.0
    %843 = vmatpush1.xpose.msra.mxu0 0.0
    %844 = vmatprep.subr.mxu0 0.0
    %845 = vmatpush1.xpose.msra.mxu0 0.0
    %846 = vmatprep.subr.mxu0 0.0
    %847 = vmatpush1.xpose.msra.mxu0 0.0
    %848 = vmatprep.subr.mxu0 0.0
    %849 = vmatpush1.xpose.msra.mxu0 0.0
    %850 = vmatprep.subr.mxu0 0.0
    %851 = vmatpush1.xpose.msra.mxu0 0.0
    %852 = vmatprep.subr.mxu0 0.0
    %853 = vmatpush1.xpose.msra.mxu0 0.0
    %854 = vmatprep.subr.mxu0 0.0
    %855 = vmatpush1.xpose.msra.mxu0 0.0
    %856 = vmatprep.subr.mxu0 0.0
    %857 = vmatpush1.xpose.msra.mxu0 0.0
    %858 = vmatprep.subr.mxu0 0.0
    %859 = vmatpush1.xpose.msra.mxu0 0.0
    %860 = vmatprep.subr.mxu0 0.0
    %861 = vmatpush1.xpose.msra.mxu0 0.0
    %862 = vmatprep.subr.mxu0 0.0
    %863 = vmatpush1.xpose.msra.mxu0 0.0
    %864 = vmatprep.subr.mxu0 0.0
    %865 = vmatpush1.xpose.msra.mxu0 0.0
    %866 = vmatprep.subr.mxu0 0.0
    %867 = vmatpush1.xpose.msra.mxu0 0.0
    %868 = vmatprep.subr.mxu0 0.0
    %869 = vmatpush1.xpose.msra.mxu0 0.0
    %870 = vmatprep.subr.mxu0 0.0
    %871 = vmatpush1.xpose.msra.mxu0 0.0
    %872 = vmatprep.subr.mxu0 0.0
    %873 = vmatpush1.xpose.msra.mxu0 0.0
    %874 = vmatprep.subr.mxu0 0.0
    %875 = vmatpush1.xpose.msra.mxu0 0.0
    %876 = vmatprep.subr.mxu0 0.0
    %877 = vmatpush1.xpose.msra.mxu0 0.0
    %878 = vmatprep.subr.mxu0 0.0
    %879 = vmatpush1.xpose.msra.mxu0 0.0
    %880 = vmatprep.subr.mxu0 0.0
    %881 = vmatpush1.xpose.msra.mxu0 0.0
    %882 = vmatprep.subr.mxu0 0.0
    %883 = vmatpush1.xpose.msra.mxu0 0.0
    %884 = vmatprep.subr.mxu0 0.0
    %885 = vmatpush1.xpose.msra.mxu0 0.0
    %886 = vmatprep.subr.mxu0 0.0
    %887 = vmatpush1.xpose.msra.mxu0 0.0
    %888 = vmatprep.subr.mxu0 0.0
    %889 = vmatpush1.xpose.msra.mxu0 0.0
    %890 = vmatprep.subr.mxu0 0.0
    %891 = vmatpush1.xpose.msra.mxu0 0.0
    %892 = vmatprep.subr.mxu0 0.0
    %893 = vmatpush1.xpose.msra.mxu0 0.0
    %894 = vmatprep.subr.mxu0 0.0
    %895 = vmatpush1.xpose.msra.mxu0 0.0
    %896 = vmatprep.subr.mxu0 0.0
    %897 = vmatpush1.xpose.msra.mxu0 0.0
    %898 = vmatprep.subr.mxu0 0.0
    %899 = vmatpush1.xpose.msra.mxu0 0.0
    %900 = vmatprep.subr.mxu0 0.0
    %901 = vmatpush1.xpose.msra.mxu0 0.0
    %902 = vmatprep.mubr.f32.mxu0 0.0
    %v903 = vand.u32 %v48, 4294901760
    %904 = vmatmul.mubr.f32.gmra.mrb[0].mxu0 %v903
    %v905 = vpop.f32.mrb[0].mxu0
    %v906 = vadd.f32 %v829, %v905
    %v907 = vpop.f32.mrb[0].mxu0
    %908 = vdwg.mxu0
    %909 = vmatprep.subr.mxu0 0.0
    %v910 = vand.u32 %v518, 4294901760
    %911 = vmatpush1.xpose.msra.mxu0 %v910
    %912 = vmatprep.subr.mxu0 0.0
    %v913 = vand.u32 %v521, 4294901760
    %914 = vmatpush1.xpose.msra.mxu0 %v913
    %915 = vmatprep.subr.mxu0 0.0
    %916 = vmatpush1.xpose.msra.mxu0 0.0
    %917 = vmatprep.subr.mxu0 0.0
    %918 = vmatpush1.xpose.msra.mxu0 0.0
    %919 = vmatprep.subr.mxu0 0.0
    %920 = vmatpush1.xpose.msra.mxu0 0.0
    %921 = vmatprep.subr.mxu0 0.0
    %922 = vmatpush1.xpose.msra.mxu0 0.0
    %923 = vmatprep.subr.mxu0 0.0
    %924 = vmatpush1.xpose.msra.mxu0 0.0
    %925 = vmatprep.subr.mxu0 0.0
    %926 = vmatpush1.xpose.msra.mxu0 0.0
    %927 = vmatprep.subr.mxu0 0.0
    %928 = vmatpush1.xpose.msra.mxu0 0.0
    %929 = vmatprep.subr.mxu0 0.0
    %930 = vmatpush1.xpose.msra.mxu0 0.0
    %931 = vmatprep.subr.mxu0 0.0
    %932 = vmatpush1.xpose.msra.mxu0 0.0
    %933 = vmatprep.subr.mxu0 0.0
    %934 = vmatpush1.xpose.msra.mxu0 0.0
    %935 = vmatprep.subr.mxu0 0.0
    %936 = vmatpush1.xpose.msra.mxu0 0.0
    %937 = vmatprep.subr.mxu0 0.0
    %938 = vmatpush1.xpose.msra.mxu0 0.0
    %939 = vmatprep.subr.mxu0 0.0
    %940 = vmatpush1.xpose.msra.mxu0 0.0
    %941 = vmatprep.subr.mxu0 0.0
    %942 = vmatpush1.xpose.msra.mxu0 0.0
    %943 = vmatprep.subr.mxu0 0.0
    %944 = vmatpush1.xpose.msra.mxu0 0.0
    %945 = vmatprep.subr.mxu0 0.0
    %946 = vmatpush1.xpose.msra.mxu0 0.0
    %947 = vmatprep.subr.mxu0 0.0
    %948 = vmatpush1.xpose.msra.mxu0 0.0
    %949 = vmatprep.subr.mxu0 0.0
    %950 = vmatpush1.xpose.msra.mxu0 0.0
    %951 = vmatprep.subr.mxu0 0.0
    %952 = vmatpush1.xpose.msra.mxu0 0.0
    %953 = vmatprep.subr.mxu0 0.0
    %954 = vmatpush1.xpose.msra.mxu0 0.0
    %955 = vmatprep.subr.mxu0 0.0
    %956 = vmatpush1.xpose.msra.mxu0 0.0
    %957 = vmatprep.subr.mxu0 0.0
    %958 = vmatpush1.xpose.msra.mxu0 0.0
    %959 = vmatprep.subr.mxu0 0.0
    %960 = vmatpush1.xpose.msra.mxu0 0.0
    %961 = vmatprep.subr.mxu0 0.0
    %962 = vmatpush1.xpose.msra.mxu0 0.0
    %963 = vmatprep.subr.mxu0 0.0
    %964 = vmatpush1.xpose.msra.mxu0 0.0
    %965 = vmatprep.subr.mxu0 0.0
    %966 = vmatpush1.xpose.msra.mxu0 0.0
    %967 = vmatprep.subr.mxu0 0.0
    %968 = vmatpush1.xpose.msra.mxu0 0.0
    %969 = vmatprep.subr.mxu0 0.0
    %970 = vmatpush1.xpose.msra.mxu0 0.0
    %971 = vmatprep.subr.mxu0 0.0
    %972 = vmatpush1.xpose.msra.mxu0 0.0
    %973 = vmatprep.subr.mxu0 0.0
    %974 = vmatpush1.xpose.msra.mxu0 0.0
    %975 = vmatprep.mubr.f32.mxu0 0.0
    %v976 = vand.u32 %v48, 4294901760
    %977 = vmatmul.mubr.f32.gmra.mrb[0].mxu0 %v976
    %v978 = vpop.f32.mrb[0].mxu0
    %v979 = vadd.f32 %v906, %v978
    %v980 = vpop.f32.mrb[0].mxu0
    %981 = vdwg.mxu0
    %v982 = vmul.f32 %v42, %v42
    %v983 = vmul.f32 %v43, %v43
    %v985 = vsel %vm46, %v982, 0
    %v988 = vsel %vm46, %v983, 0
    %990 = vmatprep.subr.mxu0 0.0
    %v991 = vand.u32 %v985, 4294901760
    %992 = vmatpush1.xpose.msra.mxu0 %v991
    %993 = vmatprep.subr.mxu0 0.0
    %v994 = vand.u32 %v988, 4294901760
    %995 = vmatpush1.xpose.msra.mxu0 %v994
    %996 = vmatprep.subr.mxu0 0.0
    %997 = vmatpush1.xpose.msra.mxu0 0.0
    %998 = vmatprep.subr.mxu0 0.0
    %999 = vmatpush1.xpose.msra.mxu0 0.0
    %1000 = vmatprep.subr.mxu0 0.0
    %1001 = vmatpush1.xpose.msra.mxu0 0.0
    %1002 = vmatprep.subr.mxu0 0.0
    %1003 = vmatpush1.xpose.msra.mxu0 0.0
    %1004 = vmatprep.subr.mxu0 0.0
    %1005 = vmatpush1.xpose.msra.mxu0 0.0
    %1006 = vmatprep.subr.mxu0 0.0
    %1007 = vmatpush1.xpose.msra.mxu0 0.0
    %1008 = vmatprep.subr.mxu0 0.0
    %1009 = vmatpush1.xpose.msra.mxu0 0.0
    %1010 = vmatprep.subr.mxu0 0.0
    %1011 = vmatpush1.xpose.msra.mxu0 0.0
    %1012 = vmatprep.subr.mxu0 0.0
    %1013 = vmatpush1.xpose.msra.mxu0 0.0
    %1014 = vmatprep.subr.mxu0 0.0
    %1015 = vmatpush1.xpose.msra.mxu0 0.0
    %1016 = vmatprep.subr.mxu0 0.0
    %1017 = vmatpush1.xpose.msra.mxu0 0.0
    %1018 = vmatprep.subr.mxu0 0.0
    %1019 = vmatpush1.xpose.msra.mxu0 0.0
    %1020 = vmatprep.subr.mxu0 0.0
    %1021 = vmatpush1.xpose.msra.mxu0 0.0
    %1022 = vmatprep.subr.mxu0 0.0
    %1023 = vmatpush1.xpose.msra.mxu0 0.0
    %1024 = vmatprep.subr.mxu0 0.0
    %1025 = vmatpush1.xpose.msra.mxu0 0.0
    %1026 = vmatprep.subr.mxu0 0.0
    %1027 = vmatpush1.xpose.msra.mxu0 0.0
    %1028 = vmatprep.subr.mxu0 0.0
    %1029 = vmatpush1.xpose.msra.mxu0 0.0
    %1030 = vmatprep.subr.mxu0 0.0
    %1031 = vmatpush1.xpose.msra.mxu0 0.0
    %1032 = vmatprep.subr.mxu0 0.0
    %1033 = vmatpush1.xpose.msra.mxu0 0.0
    %1034 = vmatprep.subr.mxu0 0.0
    %1035 = vmatpush1.xpose.msra.mxu0 0.0
    %1036 = vmatprep.subr.mxu0 0.0
    %1037 = vmatpush1.xpose.msra.mxu0 0.0
    %1038 = vmatprep.subr.mxu0 0.0
    %1039 = vmatpush1.xpose.msra.mxu0 0.0
    %1040 = vmatprep.subr.mxu0 0.0
    %1041 = vmatpush1.xpose.msra.mxu0 0.0
    %1042 = vmatprep.subr.mxu0 0.0
    %1043 = vmatpush1.xpose.msra.mxu0 0.0
    %1044 = vmatprep.subr.mxu0 0.0
    %1045 = vmatpush1.xpose.msra.mxu0 0.0
    %1046 = vmatprep.subr.mxu0 0.0
    %1047 = vmatpush1.xpose.msra.mxu0 0.0
    %1048 = vmatprep.subr.mxu0 0.0
    %1049 = vmatpush1.xpose.msra.mxu0 0.0
    %1050 = vmatprep.subr.mxu0 0.0
    %1051 = vmatpush1.xpose.msra.mxu0 0.0
    %1052 = vmatprep.subr.mxu0 0.0
    %1053 = vmatpush1.xpose.msra.mxu0 0.0
    %1054 = vmatprep.subr.mxu0 0.0
    %1055 = vmatpush1.xpose.msra.mxu0 0.0
    %1056 = vmatprep.mubr.f32.mxu0 0.0
    %v1057 = vand.u32 %v48, 4294901760
    %v1058 = vsub.f32 %v48, %v1057
    %v1059 = vand.u32 %v1058, 4294901760
    %v1060 = vsub.f32 %v1058, %v1059
    %v1061 = vand.u32 %v1060, 4294901760
    %1062 = vmatmul.mubr.f32.gmra.mrb[0].mxu0 %v1061
    %v1063 = vpop.f32.mrb[0].mxu0
    %v1064 = vadd.f32 0.0, %v1063
    %v1065 = vpop.f32.mrb[0].mxu0
    %1066 = vdwg.mxu0
    %1067 = vmatprep.subr.mxu0 0.0
    %v1068 = vand.u32 %v985, 4294901760
    %v1069 = vsub.f32 %v985, %v1068
    %v1070 = vand.u32 %v1069, 4294901760
    %v1071 = vsub.f32 %v1069, %v1070
    %v1072 = vand.u32 %v1071, 4294901760
    %1073 = vmatpush1.xpose.msra.mxu0 %v1072
    %1074 = vmatprep.subr.mxu0 0.0
    %v1075 = vand.u32 %v988, 4294901760
    %v1076 = vsub.f32 %v988, %v1075
    %v1077 = vand.u32 %v1076, 4294901760
    %v1078 = vsub.f32 %v1076, %v1077
    %v1079 = vand.u32 %v1078, 4294901760
    %1080 = vmatpush1.xpose.msra.mxu0 %v1079
    %1081 = vmatprep.subr.mxu0 0.0
    %1082 = vmatpush1.xpose.msra.mxu0 0.0
    %1083 = vmatprep.subr.mxu0 0.0
    %1084 = vmatpush1.xpose.msra.mxu0 0.0
    %1085 = vmatprep.subr.mxu0 0.0
    %1086 = vmatpush1.xpose.msra.mxu0 0.0
    %1087 = vmatprep.subr.mxu0 0.0
    %1088 = vmatpush1.xpose.msra.mxu0 0.0
    %1089 = vmatprep.subr.mxu0 0.0
    %1090 = vmatpush1.xpose.msra.mxu0 0.0
    %1091 = vmatprep.subr.mxu0 0.0
    %1092 = vmatpush1.xpose.msra.mxu0 0.0
    %1093 = vmatprep.subr.mxu0 0.0
    %1094 = vmatpush1.xpose.msra.mxu0 0.0
    %1095 = vmatprep.subr.mxu0 0.0
    %1096 = vmatpush1.xpose.msra.mxu0 0.0
    %1097 = vmatprep.subr.mxu0 0.0
    %1098 = vmatpush1.xpose.msra.mxu0 0.0
    %1099 = vmatprep.subr.mxu0 0.0
    %1100 = vmatpush1.xpose.msra.mxu0 0.0
    %1101 = vmatprep.subr.mxu0 0.0
    %1102 = vmatpush1.xpose.msra.mxu0 0.0
    %1103 = vmatprep.subr.mxu0 0.0
    %1104 = vmatpush1.xpose.msra.mxu0 0.0
    %1105 = vmatprep.subr.mxu0 0.0
    %1106 = vmatpush1.xpose.msra.mxu0 0.0
    %1107 = vmatprep.subr.mxu0 0.0
    %1108 = vmatpush1.xpose.msra.mxu0 0.0
    %1109 = vmatprep.subr.mxu0 0.0
    %1110 = vmatpush1.xpose.msra.mxu0 0.0
    %1111 = vmatprep.subr.mxu0 0.0
    %1112 = vmatpush1.xpose.msra.mxu0 0.0
    %1113 = vmatprep.subr.mxu0 0.0
    %1114 = vmatpush1.xpose.msra.mxu0 0.0
    %1115 = vmatprep.subr.mxu0 0.0
    %1116 = vmatpush1.xpose.msra.mxu0 0.0
    %1117 = vmatprep.subr.mxu0 0.0
    %1118 = vmatpush1.xpose.msra.mxu0 0.0
    %1119 = vmatprep.subr.mxu0 0.0
    %1120 = vmatpush1.xpose.msra.mxu0 0.0
    %1121 = vmatprep.subr.mxu0 0.0
    %1122 = vmatpush1.xpose.msra.mxu0 0.0
    %1123 = vmatprep.subr.mxu0 0.0
    %1124 = vmatpush1.xpose.msra.mxu0 0.0
    %1125 = vmatprep.subr.mxu0 0.0
    %1126 = vmatpush1.xpose.msra.mxu0 0.0
    %1127 = vmatprep.subr.mxu0 0.0
    %1128 = vmatpush1.xpose.msra.mxu0 0.0
    %1129 = vmatprep.subr.mxu0 0.0
    %1130 = vmatpush1.xpose.msra.mxu0 0.0
    %1131 = vmatprep.subr.mxu0 0.0
    %1132 = vmatpush1.xpose.msra.mxu0 0.0
    %1133 = vmatprep.subr.mxu0 0.0
    %1134 = vmatpush1.xpose.msra.mxu0 0.0
    %1135 = vmatprep.subr.mxu0 0.0
    %1136 = vmatpush1.xpose.msra.mxu0 0.0
    %1137 = vmatprep.subr.mxu0 0.0
    %1138 = vmatpush1.xpose.msra.mxu0 0.0
    %1139 = vmatprep.subr.mxu0 0.0
    %1140 = vmatpush1.xpose.msra.mxu0 0.0
    %1141 = vmatprep.mubr.f32.mxu0 0.0
    %v1142 = vand.u32 %v48, 4294901760
    %1143 = vmatmul.mubr.f32.gmra.mrb[0].mxu0 %v1142
    %v1144 = vpop.f32.mrb[0].mxu0
    %v1145 = vadd.f32 %v1064, %v1144
    %v1146 = vpop.f32.mrb[0].mxu0
    %1147 = vdwg.mxu0
    %1148 = vmatprep.subr.mxu0 0.0
    %v1149 = vand.u32 %v985, 4294901760
    %v1150 = vsub.f32 %v985, %v1149
    %1151 = vmatpush1.xpose.msra.mxu0 %v1150
    %1152 = vmatprep.subr.mxu0 0.0
    %v1153 = vand.u32 %v988, 4294901760
    %v1154 = vsub.f32 %v988, %v1153
    %1155 = vmatpush1.xpose.msra.mxu0 %v1154
    %1156 = vmatprep.subr.mxu0 0.0
    %1157 = vmatpush1.xpose.msra.mxu0 0.0
    %1158 = vmatprep.subr.mxu0 0.0
    %1159 = vmatpush1.xpose.msra.mxu0 0.0
    %1160 = vmatprep.subr.mxu0 0.0
    %1161 = vmatpush1.xpose.msra.mxu0 0.0
    %1162 = vmatprep.subr.mxu0 0.0
    %1163 = vmatpush1.xpose.msra.mxu0 0.0
    %1164 = vmatprep.subr.mxu0 0.0
    %1165 = vmatpush1.xpose.msra.mxu0 0.0
    %1166 = vmatprep.subr.mxu0 0.0
    %1167 = vmatpush1.xpose.msra.mxu0 0.0
    %1168 = vmatprep.subr.mxu0 0.0
    %1169 = vmatpush1.xpose.msra.mxu0 0.0
    %1170 = vmatprep.subr.mxu0 0.0
    %1171 = vmatpush1.xpose.msra.mxu0 0.0
    %1172 = vmatprep.subr.mxu0 0.0
    %1173 = vmatpush1.xpose.msra.mxu0 0.0
    %1174 = vmatprep.subr.mxu0 0.0
    %1175 = vmatpush1.xpose.msra.mxu0 0.0
    %1176 = vmatprep.subr.mxu0 0.0
    %1177 = vmatpush1.xpose.msra.mxu0 0.0
    %1178 = vmatprep.subr.mxu0 0.0
    %1179 = vmatpush1.xpose.msra.mxu0 0.0
    %1180 = vmatprep.subr.mxu0 0.0
    %1181 = vmatpush1.xpose.msra.mxu0 0.0
    %1182 = vmatprep.subr.mxu0 0.0
    %1183 = vmatpush1.xpose.msra.mxu0 0.0
    %1184 = vmatprep.subr.mxu0 0.0
    %1185 = vmatpush1.xpose.msra.mxu0 0.0
    %1186 = vmatprep.subr.mxu0 0.0
    %1187 = vmatpush1.xpose.msra.mxu0 0.0
    %1188 = vmatprep.subr.mxu0 0.0
    %1189 = vmatpush1.xpose.msra.mxu0 0.0
    %1190 = vmatprep.subr.mxu0 0.0
    %1191 = vmatpush1.xpose.msra.mxu0 0.0
    %1192 = vmatprep.subr.mxu0 0.0
    %1193 = vmatpush1.xpose.msra.mxu0 0.0
    %1194 = vmatprep.subr.mxu0 0.0
    %1195 = vmatpush1.xpose.msra.mxu0 0.0
    %1196 = vmatprep.subr.mxu0 0.0
    %1197 = vmatpush1.xpose.msra.mxu0 0.0
    %1198 = vmatprep.subr.mxu0 0.0
    %1199 = vmatpush1.xpose.msra.mxu0 0.0
    %1200 = vmatprep.subr.mxu0 0.0
    %1201 = vmatpush1.xpose.msra.mxu0 0.0
    %1202 = vmatprep.subr.mxu0 0.0
    %1203 = vmatpush1.xpose.msra.mxu0 0.0
    %1204 = vmatprep.subr.mxu0 0.0
    %1205 = vmatpush1.xpose.msra.mxu0 0.0
    %1206 = vmatprep.subr.mxu0 0.0
    %1207 = vmatpush1.xpose.msra.mxu0 0.0
    %1208 = vmatprep.subr.mxu0 0.0
    %1209 = vmatpush1.xpose.msra.mxu0 0.0
    %1210 = vmatprep.subr.mxu0 0.0
    %1211 = vmatpush1.xpose.msra.mxu0 0.0
    %1212 = vmatprep.subr.mxu0 0.0
    %1213 = vmatpush1.xpose.msra.mxu0 0.0
    %1214 = vmatprep.subr.mxu0 0.0
    %1215 = vmatpush1.xpose.msra.mxu0 0.0
    %1216 = vmatprep.mubr.f32.mxu0 0.0
    %v1217 = vand.u32 %v48, 4294901760
    %v1218 = vsub.f32 %v48, %v1217
    %1219 = vmatmul.mubr.f32.gmra.mrb[0].mxu0 %v1218
    %v1220 = vpop.f32.mrb[0].mxu0
    %v1221 = vadd.f32 %v1145, %v1220
    %v1222 = vpop.f32.mrb[0].mxu0
    %1223 = vdwg.mxu0
    %1224 = vmatprep.subr.mxu0 0.0
    %v1225 = vand.u32 %v985, 4294901760
    %1226 = vmatpush1.xpose.msra.mxu0 %v1225
    %1227 = vmatprep.subr.mxu0 0.0
    %v1228 = vand.u32 %v988, 4294901760
    %1229 = vmatpush1.xpose.msra.mxu0 %v1228
    %1230 = vmatprep.subr.mxu0 0.0
    %1231 = vmatpush1.xpose.msra.mxu0 0.0
    %1232 = vmatprep.subr.mxu0 0.0
    %1233 = vmatpush1.xpose.msra.mxu0 0.0
    %1234 = vmatprep.subr.mxu0 0.0
    %1235 = vmatpush1.xpose.msra.mxu0 0.0
    %1236 = vmatprep.subr.mxu0 0.0
    %1237 = vmatpush1.xpose.msra.mxu0 0.0
    %1238 = vmatprep.subr.mxu0 0.0
    %1239 = vmatpush1.xpose.msra.mxu0 0.0
    %1240 = vmatprep.subr.mxu0 0.0
    %1241 = vmatpush1.xpose.msra.mxu0 0.0
    %1242 = vmatprep.subr.mxu0 0.0
    %1243 = vmatpush1.xpose.msra.mxu0 0.0
    %1244 = vmatprep.subr.mxu0 0.0
    %1245 = vmatpush1.xpose.msra.mxu0 0.0
    %1246 = vmatprep.subr.mxu0 0.0
    %1247 = vmatpush1.xpose.msra.mxu0 0.0
    %1248 = vmatprep.subr.mxu0 0.0
    %1249 = vmatpush1.xpose.msra.mxu0 0.0
    %1250 = vmatprep.subr.mxu0 0.0
    %1251 = vmatpush1.xpose.msra.mxu0 0.0
    %1252 = vmatprep.subr.mxu0 0.0
    %1253 = vmatpush1.xpose.msra.mxu0 0.0
    %1254 = vmatprep.subr.mxu0 0.0
    %1255 = vmatpush1.xpose.msra.mxu0 0.0
    %1256 = vmatprep.subr.mxu0 0.0
    %1257 = vmatpush1.xpose.msra.mxu0 0.0
    %1258 = vmatprep.subr.mxu0 0.0
    %1259 = vmatpush1.xpose.msra.mxu0 0.0
    %1260 = vmatprep.subr.mxu0 0.0
    %1261 = vmatpush1.xpose.msra.mxu0 0.0
    %1262 = vmatprep.subr.mxu0 0.0
    %1263 = vmatpush1.xpose.msra.mxu0 0.0
    %1264 = vmatprep.subr.mxu0 0.0
    %1265 = vmatpush1.xpose.msra.mxu0 0.0
    %1266 = vmatprep.subr.mxu0 0.0
    %1267 = vmatpush1.xpose.msra.mxu0 0.0
    %1268 = vmatprep.subr.mxu0 0.0
    %1269 = vmatpush1.xpose.msra.mxu0 0.0
    %1270 = vmatprep.subr.mxu0 0.0
    %1271 = vmatpush1.xpose.msra.mxu0 0.0
    %1272 = vmatprep.subr.mxu0 0.0
    %1273 = vmatpush1.xpose.msra.mxu0 0.0
    %1274 = vmatprep.subr.mxu0 0.0
    %1275 = vmatpush1.xpose.msra.mxu0 0.0
    %1276 = vmatprep.subr.mxu0 0.0
    %1277 = vmatpush1.xpose.msra.mxu0 0.0
    %1278 = vmatprep.subr.mxu0 0.0
    %1279 = vmatpush1.xpose.msra.mxu0 0.0
    %1280 = vmatprep.subr.mxu0 0.0
    %1281 = vmatpush1.xpose.msra.mxu0 0.0
    %1282 = vmatprep.subr.mxu0 0.0
    %1283 = vmatpush1.xpose.msra.mxu0 0.0
    %1284 = vmatprep.subr.mxu0 0.0
    %1285 = vmatpush1.xpose.msra.mxu0 0.0
    %1286 = vmatprep.subr.mxu0 0.0
    %1287 = vmatpush1.xpose.msra.mxu0 0.0
    %1288 = vmatprep.subr.mxu0 0.0
    %1289 = vmatpush1.xpose.msra.mxu0 0.0
    %1290 = vmatprep.mubr.f32.mxu0 0.0
    %v1291 = vand.u32 %v48, 4294901760
    %v1292 = vsub.f32 %v48, %v1291
    %v1293 = vand.u32 %v1292, 4294901760
    %1294 = vmatmul.mubr.f32.gmra.mrb[0].mxu0 %v1293
    %v1295 = vpop.f32.mrb[0].mxu0
    %v1296 = vadd.f32 %v1221, %v1295
    %v1297 = vpop.f32.mrb[0].mxu0
    %1298 = vdwg.mxu0
    %1299 = vmatprep.subr.mxu0 0.0
    %v1300 = vand.u32 %v985, 4294901760
    %v1301 = vsub.f32 %v985, %v1300
    %v1302 = vand.u32 %v1301, 4294901760
    %1303 = vmatpush1.xpose.msra.mxu0 %v1302
    %1304 = vmatprep.subr.mxu0 0.0
    %v1305 = vand.u32 %v988, 4294901760
    %v1306 = vsub.f32 %v988, %v1305
    %v1307 = vand.u32 %v1306, 4294901760
    %1308 = vmatpush1.xpose.msra.mxu0 %v1307
    %1309 = vmatprep.subr.mxu0 0.0
    %1310 = vmatpush1.xpose.msra.mxu0 0.0
    %1311 = vmatprep.subr.mxu0 0.0
    %1312 = vmatpush1.xpose.msra.mxu0 0.0
    %1313 = vmatprep.subr.mxu0 0.0
    %1314 = vmatpush1.xpose.msra.mxu0 0.0
    %1315 = vmatprep.subr.mxu0 0.0
    %1316 = vmatpush1.xpose.msra.mxu0 0.0
    %1317 = vmatprep.subr.mxu0 0.0
    %1318 = vmatpush1.xpose.msra.mxu0 0.0
    %1319 = vmatprep.subr.mxu0 0.0
    %1320 = vmatpush1.xpose.msra.mxu0 0.0
    %1321 = vmatprep.subr.mxu0 0.0
    %1322 = vmatpush1.xpose.msra.mxu0 0.0
    %1323 = vmatprep.subr.mxu0 0.0
    %1324 = vmatpush1.xpose.msra.mxu0 0.0
    %1325 = vmatprep.subr.mxu0 0.0
    %1326 = vmatpush1.xpose.msra.mxu0 0.0
    %1327 = vmatprep.subr.mxu0 0.0
    %1328 = vmatpush1.xpose.msra.mxu0 0.0
    %1329 = vmatprep.subr.mxu0 0.0
    %1330 = vmatpush1.xpose.msra.mxu0 0.0
    %1331 = vmatprep.subr.mxu0 0.0
    %1332 = vmatpush1.xpose.msra.mxu0 0.0
    %1333 = vmatprep.subr.mxu0 0.0
    %1334 = vmatpush1.xpose.msra.mxu0 0.0
    %1335 = vmatprep.subr.mxu0 0.0
    %1336 = vmatpush1.xpose.msra.mxu0 0.0
    %1337 = vmatprep.subr.mxu0 0.0
    %1338 = vmatpush1.xpose.msra.mxu0 0.0
    %1339 = vmatprep.subr.mxu0 0.0
    %1340 = vmatpush1.xpose.msra.mxu0 0.0
    %1341 = vmatprep.subr.mxu0 0.0
    %1342 = vmatpush1.xpose.msra.mxu0 0.0
    %1343 = vmatprep.subr.mxu0 0.0
    %1344 = vmatpush1.xpose.msra.mxu0 0.0
    %1345 = vmatprep.subr.mxu0 0.0
    %1346 = vmatpush1.xpose.msra.mxu0 0.0
    %1347 = vmatprep.subr.mxu0 0.0
    %1348 = vmatpush1.xpose.msra.mxu0 0.0
    %1349 = vmatprep.subr.mxu0 0.0
    %1350 = vmatpush1.xpose.msra.mxu0 0.0
    %1351 = vmatprep.subr.mxu0 0.0
    %1352 = vmatpush1.xpose.msra.mxu0 0.0
    %1353 = vmatprep.subr.mxu0 0.0
    %1354 = vmatpush1.xpose.msra.mxu0 0.0
    %1355 = vmatprep.subr.mxu0 0.0
    %1356 = vmatpush1.xpose.msra.mxu0 0.0
    %1357 = vmatprep.subr.mxu0 0.0
    %1358 = vmatpush1.xpose.msra.mxu0 0.0
    %1359 = vmatprep.subr.mxu0 0.0
    %1360 = vmatpush1.xpose.msra.mxu0 0.0
    %1361 = vmatprep.subr.mxu0 0.0
    %1362 = vmatpush1.xpose.msra.mxu0 0.0
    %1363 = vmatprep.subr.mxu0 0.0
    %1364 = vmatpush1.xpose.msra.mxu0 0.0
    %1365 = vmatprep.subr.mxu0 0.0
    %1366 = vmatpush1.xpose.msra.mxu0 0.0
    %1367 = vmatprep.subr.mxu0 0.0
    %1368 = vmatpush1.xpose.msra.mxu0 0.0
    %1369 = vmatprep.mubr.f32.mxu0 0.0
    %v1370 = vand.u32 %v48, 4294901760
    %1371 = vmatmul.mubr.f32.gmra.mrb[0].mxu0 %v1370
    %v1372 = vpop.f32.mrb[0].mxu0
    %v1373 = vadd.f32 %v1296, %v1372
    %v1374 = vpop.f32.mrb[0].mxu0
    %1375 = vdwg.mxu0
    %1376 = vmatprep.subr.mxu0 0.0
    %v1377 = vand.u32 %v985, 4294901760
    %1378 = vmatpush1.xpose.msra.mxu0 %v1377
    %1379 = vmatprep.subr.mxu0 0.0
    %v1380 = vand.u32 %v988, 4294901760
    %1381 = vmatpush1.xpose.msra.mxu0 %v1380
    %1382 = vmatprep.subr.mxu0 0.0
    %1383 = vmatpush1.xpose.msra.mxu0 0.0
    %1384 = vmatprep.subr.mxu0 0.0
    %1385 = vmatpush1.xpose.msra.mxu0 0.0
    %1386 = vmatprep.subr.mxu0 0.0
    %1387 = vmatpush1.xpose.msra.mxu0 0.0
    %1388 = vmatprep.subr.mxu0 0.0
    %1389 = vmatpush1.xpose.msra.mxu0 0.0
    %1390 = vmatprep.subr.mxu0 0.0
    %1391 = vmatpush1.xpose.msra.mxu0 0.0
    %1392 = vmatprep.subr.mxu0 0.0
    %1393 = vmatpush1.xpose.msra.mxu0 0.0
    %1394 = vmatprep.subr.mxu0 0.0
    %1395 = vmatpush1.xpose.msra.mxu0 0.0
    %1396 = vmatprep.subr.mxu0 0.0
    %1397 = vmatpush1.xpose.msra.mxu0 0.0
    %1398 = vmatprep.subr.mxu0 0.0
    %1399 = vmatpush1.xpose.msra.mxu0 0.0
    %1400 = vmatprep.subr.mxu0 0.0
    %1401 = vmatpush1.xpose.msra.mxu0 0.0
    %1402 = vmatprep.subr.mxu0 0.0
    %1403 = vmatpush1.xpose.msra.mxu0 0.0
    %1404 = vmatprep.subr.mxu0 0.0
    %1405 = vmatpush1.xpose.msra.mxu0 0.0
    %1406 = vmatprep.subr.mxu0 0.0
    %1407 = vmatpush1.xpose.msra.mxu0 0.0
    %1408 = vmatprep.subr.mxu0 0.0
    %1409 = vmatpush1.xpose.msra.mxu0 0.0
    %1410 = vmatprep.subr.mxu0 0.0
    %1411 = vmatpush1.xpose.msra.mxu0 0.0
    %1412 = vmatprep.subr.mxu0 0.0
    %1413 = vmatpush1.xpose.msra.mxu0 0.0
    %1414 = vmatprep.subr.mxu0 0.0
    %1415 = vmatpush1.xpose.msra.mxu0 0.0
    %1416 = vmatprep.subr.mxu0 0.0
    %1417 = vmatpush1.xpose.msra.mxu0 0.0
    %1418 = vmatprep.subr.mxu0 0.0
    %1419 = vmatpush1.xpose.msra.mxu0 0.0
    %1420 = vmatprep.subr.mxu0 0.0
    %1421 = vmatpush1.xpose.msra.mxu0 0.0
    %1422 = vmatprep.subr.mxu0 0.0
    %1423 = vmatpush1.xpose.msra.mxu0 0.0
    %1424 = vmatprep.subr.mxu0 0.0
    %1425 = vmatpush1.xpose.msra.mxu0 0.0
    %1426 = vmatprep.subr.mxu0 0.0
    %1427 = vmatpush1.xpose.msra.mxu0 0.0
    %1428 = vmatprep.subr.mxu0 0.0
    %1429 = vmatpush1.xpose.msra.mxu0 0.0
    %1430 = vmatprep.subr.mxu0 0.0
    %1431 = vmatpush1.xpose.msra.mxu0 0.0
    %1432 = vmatprep.subr.mxu0 0.0
    %1433 = vmatpush1.xpose.msra.mxu0 0.0
    %1434 = vmatprep.subr.mxu0 0.0
    %1435 = vmatpush1.xpose.msra.mxu0 0.0
    %1436 = vmatprep.subr.mxu0 0.0
    %1437 = vmatpush1.xpose.msra.mxu0 0.0
    %1438 = vmatprep.subr.mxu0 0.0
    %1439 = vmatpush1.xpose.msra.mxu0 0.0
    %1440 = vmatprep.subr.mxu0 0.0
    %1441 = vmatpush1.xpose.msra.mxu0 0.0
    %1442 = vmatprep.mubr.f32.mxu0 0.0
    %v1443 = vand.u32 %v48, 4294901760
    %1444 = vmatmul.mubr.f32.gmra.mrb[0].mxu0 %v1443
    %v1445 = vpop.f32.mrb[0].mxu0
    %v1446 = vadd.f32 %v1373, %v1445
    %v1447 = vpop.f32.mrb[0].mxu0
    %1448 = vdwg.mxu0
    %v1449 = vmul.f32 %v979, %v1446
    %v1450 = vmax.f32 %v1449, 1e-12
    %v1451 = vrsqrt.pop %v1450
    %v1452 = vmul.f32 %v512, %v1451
    %v1453 = vsub.f32 0.0, %v1452
    %v1454 = vmul.f32 %v1453, 1.442695
    %v1455 = vpow.pop %v1454
    %v1456 = vadd.f32 %v1455, 1.0
    %v1457 = vrcp.pop %v1456
    %v1458 = vmul.f32 1.0, %v1457
    %vm1459 = vcmask 122880
    %1460 = vst.msk [vmem:[#allocation7] sm:$0x1] %vm1459, %v1458
    // Predicated region
    $region18: #{tpu_custom_call.1} parent=1 // pred_check
      _
    $region19: #{tpu_custom_call.1} parent=1 // pred_check_branch
      %1462 = sbr.rel (0) target = $region21
    $region20: #{tpu_custom_call.1} parent=1 // pred_region
      %s1464 = ssub.s32 16, 16
      %1465 = vsyncadd [#allocation4], %s1464
      %s1467 = sshll.u32 [#allocation7], 4
      %s1468 = int_to_ptr.vmem [resolvable:$true] %s1467
      %1470 = dma.vmem_to_hbm [thread:$0]  %s1468, 16, %s2, [#allocation4]
    $region21: #{tpu_custom_call.1} parent=1 // pred_fallthru
      _
    // Predicated region
    $region22: #{tpu_custom_call.1} parent=1 // pred_check
      _
    $region23: #{tpu_custom_call.1} parent=1 // pred_check_branch
      %1472 = sbr.rel (0) target = $region25
    $region24: #{tpu_custom_call.1} parent=1 // pred_region
      %1473 = dma.done [#allocation4], 16
    $region25: #{tpu_custom_call.1} parent=1 // pred_fallthru
      _
    %1474 = vsyncpa [#allocation3], 1
    %1475 = vsyncpa [#allocation6], 1
    %1476 = vsyncpa [#allocation4], 1

</llo_original>
